<compile_context>
chip_gen: v5e
topology: v5e:2x2
jax: 0.10.0
libtpu: 0.0.40
codegen_flags: <defaults>
</compile_context>

<pallas_src>
import jax
import jax.numpy as jnp
from jax.experimental import pallas as pl
from jax.experimental.pallas import tpu as pltpu

LANE = 128      # vreg lane width
SUBLANE = 8     # vreg sublane width (row-dim padding granularity)


def _round_up(x, m):
    return (x + m - 1) // m * m


def _pad2(a, rows, cols):
    r, c = a.shape
    return jnp.pad(a, ((0, rows - r), (0, cols - c)))


# ----------------------------------------------------------------------------
# Fused kernel: the entire forward pass in one body.
# refs = (t, emb, [w,b]*n_t, W_t, W_emb, b_in, [w,b]*n_layers, w_out, b_out, o)
# Weights are bf16; biases f32; activations are cast to bf16 at each dot and
# accumulated in f32 on the MXU.
# ----------------------------------------------------------------------------
def _make_fused_kernel(n_t_layers, n_layers):
    def kernel(*refs):
        it = iter(refs)
        t_ref = next(it)
        emb_ref = next(it)

        def dense_relu(x, w_ref, b_ref):
            y = jnp.dot(x.astype(jnp.bfloat16), w_ref[...],
                        preferred_element_type=jnp.float32)
            return jnp.maximum(y + b_ref[...], 0.0)

        # t_layers chain
        t = t_ref[...]
        for _ in range(n_t_layers):
            t = dense_relu(t, next(it), next(it))

        # fc_input with split weight (replaces the feature concat)
        w_t_ref, w_e_ref, b_in_ref = next(it), next(it), next(it)
        x = (jnp.dot(t.astype(jnp.bfloat16), w_t_ref[...],
                     preferred_element_type=jnp.float32)
             + jnp.dot(emb_ref[...].astype(jnp.bfloat16), w_e_ref[...],
                       preferred_element_type=jnp.float32)
             + b_in_ref[...])
        x = jnp.maximum(x, 0.0)

        # hidden layers
        for _ in range(n_layers):
            x = dense_relu(x, next(it), next(it))

        # fc_output (raw output width -> lane-masked but 8x smaller HBM write)
        x = dense_relu(x, next(it), next(it))

        o_ref = next(it)
        o_ref[...] = x.astype(o_ref.dtype)

    return kernel


# ----------------------------------------------------------------------------
# Parameter construction (deterministic, PyTorch-like uniform init) — raw,
# unpadded (in_dim, out_dim) weights and (out_dim,) biases in f32.
# ----------------------------------------------------------------------------
def _init_linear(key, in_dim, out_dim):
    kw, kb = jax.random.split(key)
    bound = 1.0 / jnp.sqrt(jnp.float32(in_dim))
    w = jax.random.uniform(kw, (in_dim, out_dim), jnp.float32, -bound, bound)
    b = jax.random.uniform(kb, (out_dim,), jnp.float32, -bound, bound)
    return w, b


def init_params(key, t_bits, t_bits_hidden, t_bits_layers, hidden_dim,
                hidden_add, num_layers, fc_output_dim, input_dim):
    params = {"t_layers": [], "layers": []}
    keys = jax.random.split(key, t_bits_layers + num_layers + 2)
    ki = 0

    if t_bits_layers > 0:
        params["t_layers"].append(_init_linear(keys[ki], t_bits, t_bits_hidden)); ki += 1
        for _ in range(t_bits_layers - 1):
            params["t_layers"].append(
                _init_linear(keys[ki], t_bits_hidden, t_bits_hidden)); ki += 1

    t_feat = t_bits_hidden if t_bits_layers > 0 else t_bits
    params["t_feat_dim"] = t_feat
    params["fc_input"] = _init_linear(keys[ki], t_feat + input_dim, hidden_dim); ki += 1

    for i in range(num_layers):
        params["layers"].append(
            _init_linear(keys[ki], hidden_dim + i * hidden_add,
                         hidden_dim + (i + 1) * hidden_add)); ki += 1

    params["fc_output"] = _init_linear(
        keys[ki], hidden_dim + hidden_add * num_layers, fc_output_dim); ki += 1
    return params


# ----------------------------------------------------------------------------
# One-time prep:
#   * split fc_input's weight at the t / emb boundary,
#   * pad only the dims that face an in-kernel 128-wide activation
#     (first-touch K dims stay RAW so the HBM input stream stays narrow;
#      fc_output's N stays RAW so the HBM output stream stays narrow),
#   * store weights in bf16 (f32 biases).
# Zero padding + relu(0)=0 keeps padded lanes exactly zero through the stack.
# ----------------------------------------------------------------------------
def pad_kernel_params(raw):
    def lane_pad(n):
        return max(_round_up(n, LANE), LANE)

    kp = {"t_layers": [], "layers": []}

    # t-chain: layer-0 K stays raw (fed straight from HBM); later K and all N -> 128.
    t_width = None
    for li, (w, b) in enumerate(raw["t_layers"]):
        k_raw, n_raw = w.shape
        k_pad = k_raw if li == 0 else lane_pad(k_raw)
        n_pad = lane_pad(n_raw)
        kp["t_layers"].append((_pad2(w, k_pad, n_pad).astype(jnp.bfloat16),
                               _pad2(b.reshape(1, -1), 1, n_pad)))
        t_width = n_pad

    # fc_input, split at the t / emb boundary.
    w_in, b_in = raw["fc_input"]
    t_feat = raw["t_feat_dim"]
    w_t, w_e = w_in[:t_feat, :], w_in[t_feat:, :]
    n_pad = lane_pad(w_in.shape[1])
    k_t = t_width if t_width is not None else t_feat      # raw if t fed from HBM
    kp["fc_input"] = (_pad2(w_t, k_t, n_pad).astype(jnp.bfloat16),
                      _pad2(w_e, w_e.shape[0], n_pad).astype(jnp.bfloat16),
                      _pad2(b_in.reshape(1, -1), 1, n_pad))
    cur = n_pad

    # hidden layers: K matches previous padded width, N -> 128.
    for (w, b) in raw["layers"]:
        n_pad = lane_pad(w.shape[1])
        kp["layers"].append((_pad2(w, cur, n_pad).astype(jnp.bfloat16),
                             _pad2(b.reshape(1, -1), 1, n_pad)))
        cur = n_pad

    # fc_output: K padded to previous width, N kept RAW (narrow HBM writes).
    w_o, b_o = raw["fc_output"]
    kp["fc_output"] = (_pad2(w_o, cur, w_o.shape[1]).astype(jnp.bfloat16),
                       b_o.reshape(1, -1).astype(jnp.float32))
    kp["fc_output_dim"] = w_o.shape[1]
    kp["t_in_dim"] = raw["t_layers"][0][0].shape[0] if raw["t_layers"] else t_feat
    kp["emb_in_dim"] = w_e.shape[0]
    # True (unpadded) layer dims for the cost estimate.
    kp["raw_dims"] = ([tuple(w.shape) for (w, _) in raw["t_layers"]]
                      + [tuple(raw["fc_input"][0].shape)]
                      + [tuple(w.shape) for (w, _) in raw["layers"]]
                      + [tuple(raw["fc_output"][0].shape)])
    # TODO(synk): input_dim == 0 (module default) is not exercised here; the
    #             empty w_e matmul would need a dedicated no-emb code path.
    return kp


# ----------------------------------------------------------------------------
# Forward pass: single fused pallas_call, M-tiled with resident weights.
# ----------------------------------------------------------------------------
def seq_embedding_decoder_forward(kparams, t_seq, input_embedding, *, tm_max=1024):
    B, S, t_bits = t_seq.shape
    input_dim = input_embedding.shape[-1]
    M = B * S

    Kt = kparams["t_in_dim"]
    Ke = kparams["emb_in_dim"]
    assert Kt == t_bits and Ke == input_dim, (Kt, t_bits, Ke, input_dim)

    # Row tiling: minimise tail waste and keep >= 2 grid steps when M allows
    # (v7x needs >= 2 "parallel" steps to use both TensorCores).
    n_tiles = pl.cdiv(M, tm_max)
    if M >= 2 * SUBLANE:
        n_tiles = max(n_tiles, 2)
    TM = _round_up(pl.cdiv(M, n_tiles), SUBLANE)
    M_pad = _round_up(M, TM)
    grid = M_pad // TM

    # Inputs keep their RAW feature widths in HBM; only sublane-pad the rows.
    t2 = t_seq.reshape(M, t_bits).astype(jnp.float32)
    e2 = input_embedding.reshape(M, input_dim).astype(jnp.float32)
    if M_pad != M:
        t2 = jnp.pad(t2, ((0, M_pad - M), (0, 0)))
        e2 = jnp.pad(e2, ((0, M_pad - M), (0, 0)))

    # Operand list (order must match the kernel's unpacking).
    wb_ops = []
    for (w, b) in kparams["t_layers"]:
        wb_ops += [w, b]
    w_t, w_e, b_in = kparams["fc_input"]
    wb_ops += [w_t, w_e, b_in]
    for (w, b) in kparams["layers"]:
        wb_ops += [w, b]
    w_o, b_o = kparams["fc_output"]
    wb_ops += [w_o, b_o]
    ops = [t2, e2] + wb_ops

    N_out = kparams["fc_output_dim"]

    # Cost estimate from the TRUE (unpadded) dims.
    flops = int(sum(2 * M * k * n for (k, n) in kparams["raw_dims"]))
    weight_bytes = sum(int(o.size) * o.dtype.itemsize for o in wb_ops)
    bytes_accessed = int(4 * M * (t_bits + input_dim + N_out) + weight_bytes)

    # VMEM budget: double-buffered I/O streams + weights + activation headroom,
    # capped below the device's physical VMEM (generation-aware).
    stream_bytes = 2 * 4 * TM * (t_bits + input_dim + N_out)
    act_bytes = 8 * TM * LANE * 4
    est_vmem = 2 * weight_bytes + stream_bytes + act_bytes
    try:
        phys_vmem = pltpu.get_tpu_info().vmem_capacity_bytes
    except Exception:
        phys_vmem = 64 * 1024 * 1024
    vmem_limit = int(min(max(2 * est_vmem, 32 * 1024 * 1024),
                         int(0.85 * phys_vmem)))

    kernel = _make_fused_kernel(len(kparams["t_layers"]), len(kparams["layers"]))

    def row_spec(cols):
        return pl.BlockSpec((TM, cols), lambda i: (i, 0))

    def whole_spec(a, single_buffer):
        # Resident (constant-index) block; single-buffer it when supported so
        # weights occupy one VMEM copy instead of two (matters on v7x's 64 MiB).
        if single_buffer:
            return pl.BlockSpec(a.shape, lambda i: (0, 0),
                                pipeline_mode=pl.Buffered(1))
        return pl.BlockSpec(a.shape, lambda i: (0, 0))

    def _call(single_buffer_weights):
        in_specs = ([row_spec(t_bits), row_spec(input_dim)]
                    + [whole_spec(o, single_buffer_weights) for o in wb_ops])
        return pl.pallas_call(
            kernel,
            out_shape=jax.ShapeDtypeStruct((M_pad, N_out), jnp.float32),
            grid_spec=pltpu.PrefetchScalarGridSpec(
                num_scalar_prefetch=0,
                grid=(grid,),
                in_specs=in_specs,
                out_specs=pl.BlockSpec((TM, N_out), lambda i: (i, 0)),
            ),
            compiler_params=pltpu.CompilerParams(
                dimension_semantics=("parallel",),
                vmem_limit_bytes=vmem_limit),
            cost_estimate=pl.CostEstimate(flops=flops, transcendentals=0,
                                          bytes_accessed=bytes_accessed),
        )(*ops)

    if hasattr(pl, "Buffered"):
        try:
            out_pad = _call(True)
        except Exception:
            out_pad = _call(False)   # pipeline_mode=Buffered(1) unsupported here
    else:
        out_pad = _call(False)

    out = out_pad if M_pad == M else out_pad[:M]
    return out.reshape(B, S, N_out)


# ----------------------------------------------------------------------------
# References on the raw (unpadded) parameters.
# ----------------------------------------------------------------------------
def reference_forward(raw, t_seq, input_embedding):
    """Exact f32 module semantics."""
    t = t_seq
    for (w, b) in raw["t_layers"]:
        t = jax.nn.relu(t @ w + b)
    x = jnp.concatenate([t, input_embedding], axis=-1)
    x = jax.nn.relu(x @ raw["fc_input"][0] + raw["fc_input"][1])
    for (w, b) in raw["layers"]:
        x = jax.nn.relu(x @ w + b)
    x = jax.nn.relu(x @ raw["fc_output"][0] + raw["fc_output"][1])
    return x


def reference_forward_bf16(raw, t_seq, input_embedding):
    """Mimics the kernel's numerics: bf16 matmul operands, f32 accumulation."""
    def dense(x, w, b):
        y = jnp.dot(x.astype(jnp.bfloat16), w.astype(jnp.bfloat16),
                    preferred_element_type=jnp.float32)
        return jax.nn.relu(y + b)

    t = t_seq
    for (w, b) in raw["t_layers"]:
        t = dense(t, w, b)
    x = jnp.concatenate([t, input_embedding], axis=-1)
    x = dense(x, *raw["fc_input"])
    for (w, b) in raw["layers"]:
        x = dense(x, w, b)
    return dense(x, *raw["fc_output"])


if __name__ == "__main__":
    # Module hyperparameters (small, consistent with the forward pass).
    t_bits, t_bits_hidden, t_bits_layers = 8, 16, 2
    hidden_dim, hidden_add, num_layers = 32, 8, 2
    fc_output_dim, input_dim = 16, 8

    B, S = 2, 8  # batch, sequence length

    key = jax.random.PRNGKey(0)
    k_params, k_t, k_e = jax.random.split(key, 3)

    raw_params = init_params(k_params, t_bits, t_bits_hidden, t_bits_layers,
                             hidden_dim, hidden_add, num_layers,
                             fc_output_dim, input_dim)
    kernel_params = pad_kernel_params(raw_params)

    t_seq = jax.random.normal(k_t, (B, S, t_bits), jnp.float32)
    input_embedding = jax.random.normal(k_e, (B, S, input_dim), jnp.float32)

    out = seq_embedding_decoder_forward(kernel_params, t_seq, input_embedding)
    out = jax.block_until_ready(out)

    ref_bf16 = reference_forward_bf16(raw_params, t_seq, input_embedding)
    ref_f32 = reference_forward(raw_params, t_seq, input_embedding)

    assert out.shape == (B, S, fc_output_dim), out.shape
    assert jnp.allclose(out, ref_bf16, atol=1e-2, rtol=1e-2), \
        "mismatch vs bf16-matmul reference"
    assert jnp.allclose(out, ref_f32, atol=1e-1, rtol=1e-1), \
        "mismatch vs f32 module reference"

    print("KERNEL_OK")
</pallas_src>

<mosaic_0001>
module attributes {stable_mosaic.version = 11 : i64} {
  func.func @kernel(%arg0: i32, %arg1: memref<8x8xf32, #tpu.memory_space<vmem>>, %arg2: memref<8x8xf32, #tpu.memory_space<vmem>>, %arg3: memref<8x128xbf16, #tpu.memory_space<vmem>>, %arg4: memref<1x128xf32, #tpu.memory_space<vmem>>, %arg5: memref<128x128xbf16, #tpu.memory_space<vmem>>, %arg6: memref<1x128xf32, #tpu.memory_space<vmem>>, %arg7: memref<128x128xbf16, #tpu.memory_space<vmem>>, %arg8: memref<8x128xbf16, #tpu.memory_space<vmem>>, %arg9: memref<1x128xf32, #tpu.memory_space<vmem>>, %arg10: memref<128x128xbf16, #tpu.memory_space<vmem>>, %arg11: memref<1x128xf32, #tpu.memory_space<vmem>>, %arg12: memref<128x128xbf16, #tpu.memory_space<vmem>>, %arg13: memref<1x128xf32, #tpu.memory_space<vmem>>, %arg14: memref<128x16xbf16, #tpu.memory_space<vmem>>, %arg15: memref<1x16xf32, #tpu.memory_space<vmem>>, %arg16: memref<8x16xf32, #tpu.memory_space<vmem>>) attributes {dimension_semantics = [#tpu.dimension_semantics<parallel>], iteration_bounds = array<i64: 2>, scalar_prefetch = 0 : i64, scratch_operands = 0 : i64, tpu.core_type = #tpu.core_type<tc>, window_params = [{transform_indices = @transform_0, window_bounds = array<i64: 8, 8>}, {transform_indices = @transform_1, window_bounds = array<i64: 8, 8>}, {pipeline_mode = #tpu.pipeline_mode<synchronous>, transform_indices = @transform_2, window_bounds = array<i64: 8, 128>}, {pipeline_mode = #tpu.pipeline_mode<synchronous>, transform_indices = @transform_3, window_bounds = array<i64: 1, 128>}, {pipeline_mode = #tpu.pipeline_mode<synchronous>, transform_indices = @transform_4, window_bounds = array<i64: 128, 128>}, {pipeline_mode = #tpu.pipeline_mode<synchronous>, transform_indices = @transform_5, window_bounds = array<i64: 1, 128>}, {pipeline_mode = #tpu.pipeline_mode<synchronous>, transform_indices = @transform_6, window_bounds = array<i64: 128, 128>}, {pipeline_mode = #tpu.pipeline_mode<synchronous>, transform_indices = @transform_7, window_bounds = array<i64: 8, 128>}, {pipeline_mode = #tpu.pipeline_mode<synchronous>, transform_indices = @transform_8, window_bounds = array<i64: 1, 128>}, {pipeline_mode = #tpu.pipeline_mode<synchronous>, transform_indices = @transform_9, window_bounds = array<i64: 128, 128>}, {pipeline_mode = #tpu.pipeline_mode<synchronous>, transform_indices = @transform_10, window_bounds = array<i64: 1, 128>}, {pipeline_mode = #tpu.pipeline_mode<synchronous>, transform_indices = @transform_11, window_bounds = array<i64: 128, 128>}, {pipeline_mode = #tpu.pipeline_mode<synchronous>, transform_indices = @transform_12, window_bounds = array<i64: 1, 128>}, {pipeline_mode = #tpu.pipeline_mode<synchronous>, transform_indices = @transform_13, window_bounds = array<i64: 128, 16>}, {pipeline_mode = #tpu.pipeline_mode<synchronous>, transform_indices = @transform_14, window_bounds = array<i64: 1, 16>}, {transform_indices = @transform_15, window_bounds = array<i64: 8, 16>}]} {
    %c0 = arith.constant 0 : index
    %c0_0 = arith.constant 0 : index
    %0 = vector.load %arg1[%c0, %c0_0] : memref<8x8xf32, #tpu.memory_space<vmem>>, vector<8x8xf32>
    %1 = arith.truncf %0 : vector<8x8xf32> to vector<8x8xbf16>
    %c0_1 = arith.constant 0 : index
    %c0_2 = arith.constant 0 : index
    %2 = vector.load %arg3[%c0_1, %c0_2] : memref<8x128xbf16, #tpu.memory_space<vmem>>, vector<8x128xbf16>
    %cst = arith.constant dense<0.000000e+00> : vector<8x128xf32>
    %3 = tpu.matmul %1, %2, %cst {dimension_numbers = #tpu.dot_dimension_numbers<[1], [0], [0], [1], [0, 0, 1, 1], [], []>} : vector<8x8xbf16>, vector<8x128xbf16>, vector<8x128xf32> -> vector<8x128xf32>
    %c0_3 = arith.constant 0 : index
    %c0_4 = arith.constant 0 : index
    %4 = vector.load %arg4[%c0_3, %c0_4] : memref<1x128xf32, #tpu.memory_space<vmem>>, vector<1x128xf32>
    %5 = vector.broadcast %4 : vector<1x128xf32> to vector<8x128xf32>
    %6 = arith.addf %3, %5 : vector<8x128xf32>
    %cst_5 = arith.constant 0.000000e+00 : f32
    %7 = vector.broadcast %cst_5 : f32 to vector<8x128xf32>
    %8 = arith.maximumf %6, %7 : vector<8x128xf32>
    %9 = arith.truncf %8 : vector<8x128xf32> to vector<8x128xbf16>
    %c0_6 = arith.constant 0 : index
    %c0_7 = arith.constant 0 : index
    %10 = vector.load %arg5[%c0_6, %c0_7] : memref<128x128xbf16, #tpu.memory_space<vmem>>, vector<128x128xbf16>
    %cst_8 = arith.constant dense<0.000000e+00> : vector<8x128xf32>
    %11 = tpu.matmul %9, %10, %cst_8 {dimension_numbers = #tpu.dot_dimension_numbers<[1], [0], [0], [1], [0, 0, 1, 1], [], []>} : vector<8x128xbf16>, vector<128x128xbf16>, vector<8x128xf32> -> vector<8x128xf32>
    %c0_9 = arith.constant 0 : index
    %c0_10 = arith.constant 0 : index
    %12 = vector.load %arg6[%c0_9, %c0_10] : memref<1x128xf32, #tpu.memory_space<vmem>>, vector<1x128xf32>
    %13 = vector.broadcast %12 : vector<1x128xf32> to vector<8x128xf32>
    %14 = arith.addf %11, %13 : vector<8x128xf32>
    %cst_11 = arith.constant 0.000000e+00 : f32
    %15 = vector.broadcast %cst_11 : f32 to vector<8x128xf32>
    %16 = arith.maximumf %14, %15 : vector<8x128xf32>
    %17 = arith.truncf %16 : vector<8x128xf32> to vector<8x128xbf16>
    %c0_12 = arith.constant 0 : index
    %c0_13 = arith.constant 0 : index
    %18 = vector.load %arg7[%c0_12, %c0_13] : memref<128x128xbf16, #tpu.memory_space<vmem>>, vector<128x128xbf16>
    %cst_14 = arith.constant dense<0.000000e+00> : vector<8x128xf32>
    %19 = tpu.matmul %17, %18, %cst_14 {dimension_numbers = #tpu.dot_dimension_numbers<[1], [0], [0], [1], [0, 0, 1, 1], [], []>} : vector<8x128xbf16>, vector<128x128xbf16>, vector<8x128xf32> -> vector<8x128xf32>
    %c0_15 = arith.constant 0 : index
    %c0_16 = arith.constant 0 : index
    %20 = vector.load %arg2[%c0_15, %c0_16] : memref<8x8xf32, #tpu.memory_space<vmem>>, vector<8x8xf32>
    %21 = arith.truncf %20 : vector<8x8xf32> to vector<8x8xbf16>
    %c0_17 = arith.constant 0 : index
    %c0_18 = arith.constant 0 : index
    %22 = vector.load %arg8[%c0_17, %c0_18] : memref<8x128xbf16, #tpu.memory_space<vmem>>, vector<8x128xbf16>
    %cst_19 = arith.constant dense<0.000000e+00> : vector<8x128xf32>
    %23 = tpu.matmul %21, %22, %cst_19 {dimension_numbers = #tpu.dot_dimension_numbers<[1], [0], [0], [1], [0, 0, 1, 1], [], []>} : vector<8x8xbf16>, vector<8x128xbf16>, vector<8x128xf32> -> vector<8x128xf32>
    %24 = arith.addf %19, %23 : vector<8x128xf32>
    %c0_20 = arith.constant 0 : index
    %c0_21 = arith.constant 0 : index
    %25 = vector.load %arg9[%c0_20, %c0_21] : memref<1x128xf32, #tpu.memory_space<vmem>>, vector<1x128xf32>
    %26 = vector.broadcast %25 : vector<1x128xf32> to vector<8x128xf32>
    %27 = arith.addf %24, %26 : vector<8x128xf32>
    %cst_22 = arith.constant 0.000000e+00 : f32
    %28 = vector.broadcast %cst_22 : f32 to vector<8x128xf32>
    %29 = arith.maximumf %27, %28 : vector<8x128xf32>
    %30 = arith.truncf %29 : vector<8x128xf32> to vector<8x128xbf16>
    %c0_23 = arith.constant 0 : index
    %c0_24 = arith.constant 0 : index
    %31 = vector.load %arg10[%c0_23, %c0_24] : memref<128x128xbf16, #tpu.memory_space<vmem>>, vector<128x128xbf16>
    %cst_25 = arith.constant dense<0.000000e+00> : vector<8x128xf32>
    %32 = tpu.matmul %30, %31, %cst_25 {dimension_numbers = #tpu.dot_dimension_numbers<[1], [0], [0], [1], [0, 0, 1, 1], [], []>} : vector<8x128xbf16>, vector<128x128xbf16>, vector<8x128xf32> -> vector<8x128xf32>
    %c0_26 = arith.constant 0 : index
    %c0_27 = arith.constant 0 : index
    %33 = vector.load %arg11[%c0_26, %c0_27] : memref<1x128xf32, #tpu.memory_space<vmem>>, vector<1x128xf32>
    %34 = vector.broadcast %33 : vector<1x128xf32> to vector<8x128xf32>
    %35 = arith.addf %32, %34 : vector<8x128xf32>
    %cst_28 = arith.constant 0.000000e+00 : f32
    %36 = vector.broadcast %cst_28 : f32 to vector<8x128xf32>
    %37 = arith.maximumf %35, %36 : vector<8x128xf32>
    %38 = arith.truncf %37 : vector<8x128xf32> to vector<8x128xbf16>
    %c0_29 = arith.constant 0 : index
    %c0_30 = arith.constant 0 : index
    %39 = vector.load %arg12[%c0_29, %c0_30] : memref<128x128xbf16, #tpu.memory_space<vmem>>, vector<128x128xbf16>
    %cst_31 = arith.constant dense<0.000000e+00> : vector<8x128xf32>
    %40 = tpu.matmul %38, %39, %cst_31 {dimension_numbers = #tpu.dot_dimension_numbers<[1], [0], [0], [1], [0, 0, 1, 1], [], []>} : vector<8x128xbf16>, vector<128x128xbf16>, vector<8x128xf32> -> vector<8x128xf32>
    %c0_32 = arith.constant 0 : index
    %c0_33 = arith.constant 0 : index
    %41 = vector.load %arg13[%c0_32, %c0_33] : memref<1x128xf32, #tpu.memory_space<vmem>>, vector<1x128xf32>
    %42 = vector.broadcast %41 : vector<1x128xf32> to vector<8x128xf32>
    %43 = arith.addf %40, %42 : vector<8x128xf32>
    %cst_34 = arith.constant 0.000000e+00 : f32
    %44 = vector.broadcast %cst_34 : f32 to vector<8x128xf32>
    %45 = arith.maximumf %43, %44 : vector<8x128xf32>
    %46 = arith.truncf %45 : vector<8x128xf32> to vector<8x128xbf16>
    %c0_35 = arith.constant 0 : index
    %c0_36 = arith.constant 0 : index
    %47 = vector.load %arg14[%c0_35, %c0_36] : memref<128x16xbf16, #tpu.memory_space<vmem>>, vector<128x16xbf16>
    %cst_37 = arith.constant dense<0.000000e+00> : vector<8x16xf32>
    %48 = tpu.matmul %46, %47, %cst_37 {dimension_numbers = #tpu.dot_dimension_numbers<[1], [0], [0], [1], [0, 0, 1, 1], [], []>} : vector<8x128xbf16>, vector<128x16xbf16>, vector<8x16xf32> -> vector<8x16xf32>
    %c0_38 = arith.constant 0 : index
    %c0_39 = arith.constant 0 : index
    %49 = vector.load %arg15[%c0_38, %c0_39] : memref<1x16xf32, #tpu.memory_space<vmem>>, vector<1x16xf32>
    %50 = vector.broadcast %49 : vector<1x16xf32> to vector<8x16xf32>
    %51 = arith.addf %48, %50 : vector<8x16xf32>
    %cst_40 = arith.constant 0.000000e+00 : f32
    %52 = vector.broadcast %cst_40 : f32 to vector<8x16xf32>
    %53 = arith.maximumf %51, %52 : vector<8x16xf32>
    %c0_41 = arith.constant 0 : index
    %c0_42 = arith.constant 0 : index
    %54 = vector.load %arg16[%c0_41, %c0_42] : memref<8x16xf32, #tpu.memory_space<vmem>>, vector<8x16xf32>
    tpu.vector_store %arg16[%c0_41, %c0_42], %53 {strides = array<i32>} : memref<8x16xf32, #tpu.memory_space<vmem>>, vector<8x16xf32>,
    return
  }
  func.func @transform_0(%arg0: i32) -> (i32, i32) {
    %c0_i32 = arith.constant 0 : i32
    %c0_i32_0 = arith.constant 0 : i32
    return %arg0, %c0_i32 : i32, i32
  }
  func.func @transform_1(%arg0: i32) -> (i32, i32) {
    %c0_i32 = arith.constant 0 : i32
    %c0_i32_0 = arith.constant 0 : i32
    return %arg0, %c0_i32 : i32, i32
  }
  func.func @transform_2(%arg0: i32) -> (i32, i32) {
    %c0_i32 = arith.constant 0 : i32
    %c0_i32_0 = arith.constant 0 : i32
    %c0_i32_1 = arith.constant 0 : i32
    return %c0_i32, %c0_i32_0 : i32, i32
  }
  func.func @transform_3(%arg0: i32) -> (i32, i32) {
    %c0_i32 = arith.constant 0 : i32
    %c0_i32_0 = arith.constant 0 : i32
    %c0_i32_1 = arith.constant 0 : i32
    return %c0_i32, %c0_i32_0 : i32, i32
  }
  func.func @transform_4(%arg0: i32) -> (i32, i32) {
    %c0_i32 = arith.constant 0 : i32
    %c0_i32_0 = arith.constant 0 : i32
    %c0_i32_1 = arith.constant 0 : i32
    return %c0_i32, %c0_i32_0 : i32, i32
  }
  func.func @transform_5(%arg0: i32) -> (i32, i32) {
    %c0_i32 = arith.constant 0 : i32
    %c0_i32_0 = arith.constant 0 : i32
    %c0_i32_1 = arith.constant 0 : i32
    return %c0_i32, %c0_i32_0 : i32, i32
  }
  func.func @transform_6(%arg0: i32) -> (i32, i32) {
    %c0_i32 = arith.constant 0 : i32
    %c0_i32_0 = arith.constant 0 : i32
    %c0_i32_1 = arith.constant 0 : i32
    return %c0_i32, %c0_i32_0 : i32, i32
  }
  func.func @transform_7(%arg0: i32) -> (i32, i32) {
    %c0_i32 = arith.constant 0 : i32
    %c0_i32_0 = arith.constant 0 : i32
    %c0_i32_1 = arith.constant 0 : i32
    return %c0_i32, %c0_i32_0 : i32, i32
  }
  func.func @transform_8(%arg0: i32) -> (i32, i32) {
    %c0_i32 = arith.constant 0 : i32
    %c0_i32_0 = arith.constant 0 : i32
    %c0_i32_1 = arith.constant 0 : i32
    return %c0_i32, %c0_i32_0 : i32, i32
  }
  func.func @transform_9(%arg0: i32) -> (i32, i32) {
    %c0_i32 = arith.constant 0 : i32
    %c0_i32_0 = arith.constant 0 : i32
    %c0_i32_1 = arith.constant 0 : i32
    return %c0_i32, %c0_i32_0 : i32, i32
  }
  func.func @transform_10(%arg0: i32) -> (i32, i32) {
    %c0_i32 = arith.constant 0 : i32
    %c0_i32_0 = arith.constant 0 : i32
    %c0_i32_1 = arith.constant 0 : i32
    return %c0_i32, %c0_i32_0 : i32, i32
  }
  func.func @transform_11(%arg0: i32) -> (i32, i32) {
    %c0_i32 = arith.constant 0 : i32
    %c0_i32_0 = arith.constant 0 : i32
    %c0_i32_1 = arith.constant 0 : i32
    return %c0_i32, %c0_i32_0 : i32, i32
  }
  func.func @transform_12(%arg0: i32) -> (i32, i32) {
    %c0_i32 = arith.constant 0 : i32
    %c0_i32_0 = arith.constant 0 : i32
    %c0_i32_1 = arith.constant 0 : i32
    return %c0_i32, %c0_i32_0 : i32, i32
  }
  func.func @transform_13(%arg0: i32) -> (i32, i32) {
    %c0_i32 = arith.constant 0 : i32
    %c0_i32_0 = arith.constant 0 : i32
    %c0_i32_1 = arith.constant 0 : i32
    return %c0_i32, %c0_i32_0 : i32, i32
  }
  func.func @transform_14(%arg0: i32) -> (i32, i32) {
    %c0_i32 = arith.constant 0 : i32
    %c0_i32_0 = arith.constant 0 : i32
    %c0_i32_1 = arith.constant 0 : i32
    return %c0_i32, %c0_i32_0 : i32, i32
  }
  func.func @transform_15(%arg0: i32) -> (i32, i32) {
    %c0_i32 = arith.constant 0 : i32
    %c0_i32_0 = arith.constant 0 : i32
    return %arg0, %c0_i32 : i32, i32
  }
}

module attributes {stable_mosaic.version = 11 : i64} {
  func.func @kernel(%arg0: i32, %arg1: memref<8x8xf32, #tpu.memory_space<vmem>>, %arg2: memref<8x8xf32, #tpu.memory_space<vmem>>, %arg3: memref<8x128xbf16, #tpu.memory_space<vmem>>, %arg4: memref<1x128xf32, #tpu.memory_space<vmem>>, %arg5: memref<128x128xbf16, #tpu.memory_space<vmem>>, %arg6: memref<1x128xf32, #tpu.memory_space<vmem>>, %arg7: memref<128x128xbf16, #tpu.memory_space<vmem>>, %arg8: memref<8x128xbf16, #tpu.memory_space<vmem>>, %arg9: memref<1x128xf32, #tpu.memory_space<vmem>>, %arg10: memref<128x128xbf16, #tpu.memory_space<vmem>>, %arg11: memref<1x128xf32, #tpu.memory_space<vmem>>, %arg12: memref<128x128xbf16, #tpu.memory_space<vmem>>, %arg13: memref<1x128xf32, #tpu.memory_space<vmem>>, %arg14: memref<128x16xbf16, #tpu.memory_space<vmem>>, %arg15: memref<1x16xf32, #tpu.memory_space<vmem>>, %arg16: memref<8x16xf32, #tpu.memory_space<vmem>>) attributes {dimension_semantics = [#tpu.dimension_semantics<parallel>], iteration_bounds = array<i64: 2>, scalar_prefetch = 0 : i64, scratch_operands = 0 : i64, tpu.core_type = #tpu.core_type<tc>, window_params = [{transform_indices = @transform_0, window_bounds = array<i64: 8, 8>}, {transform_indices = @transform_1, window_bounds = array<i64: 8, 8>}, {pipeline_mode = #tpu.pipeline_mode<synchronous>, transform_indices = @transform_2, window_bounds = array<i64: 8, 128>}, {pipeline_mode = #tpu.pipeline_mode<synchronous>, transform_indices = @transform_3, window_bounds = array<i64: 1, 128>}, {pipeline_mode = #tpu.pipeline_mode<synchronous>, transform_indices = @transform_4, window_bounds = array<i64: 128, 128>}, {pipeline_mode = #tpu.pipeline_mode<synchronous>, transform_indices = @transform_5, window_bounds = array<i64: 1, 128>}, {pipeline_mode = #tpu.pipeline_mode<synchronous>, transform_indices = @transform_6, window_bounds = array<i64: 128, 128>}, {pipeline_mode = #tpu.pipeline_mode<synchronous>, transform_indices = @transform_7, window_bounds = array<i64: 8, 128>}, {pipeline_mode = #tpu.pipeline_mode<synchronous>, transform_indices = @transform_8, window_bounds = array<i64: 1, 128>}, {pipeline_mode = #tpu.pipeline_mode<synchronous>, transform_indices = @transform_9, window_bounds = array<i64: 128, 128>}, {pipeline_mode = #tpu.pipeline_mode<synchronous>, transform_indices = @transform_10, window_bounds = array<i64: 1, 128>}, {pipeline_mode = #tpu.pipeline_mode<synchronous>, transform_indices = @transform_11, window_bounds = array<i64: 128, 128>}, {pipeline_mode = #tpu.pipeline_mode<synchronous>, transform_indices = @transform_12, window_bounds = array<i64: 1, 128>}, {pipeline_mode = #tpu.pipeline_mode<synchronous>, transform_indices = @transform_13, window_bounds = array<i64: 128, 16>}, {pipeline_mode = #tpu.pipeline_mode<synchronous>, transform_indices = @transform_14, window_bounds = array<i64: 1, 16>}, {transform_indices = @transform_15, window_bounds = array<i64: 8, 16>}]} {
    %c0 = arith.constant 0 : index
    %c0_0 = arith.constant 0 : index
    %0 = vector.load %arg1[%c0, %c0_0] : memref<8x8xf32, #tpu.memory_space<vmem>>, vector<8x8xf32>
    %1 = arith.truncf %0 : vector<8x8xf32> to vector<8x8xbf16>
    %c0_1 = arith.constant 0 : index
    %c0_2 = arith.constant 0 : index
    %2 = vector.load %arg3[%c0_1, %c0_2] : memref<8x128xbf16, #tpu.memory_space<vmem>>, vector<8x128xbf16>
    %cst = arith.constant dense<0.000000e+00> : vector<8x128xf32>
    %3 = tpu.matmul %1, %2, %cst {dimension_numbers = #tpu.dot_dimension_numbers<[1], [0], [0], [1], [0, 0, 1, 1], [], []>} : vector<8x8xbf16>, vector<8x128xbf16>, vector<8x128xf32> -> vector<8x128xf32>
    %c0_3 = arith.constant 0 : index
    %c0_4 = arith.constant 0 : index
    %4 = vector.load %arg4[%c0_3, %c0_4] : memref<1x128xf32, #tpu.memory_space<vmem>>, vector<1x128xf32>
    %5 = vector.broadcast %4 : vector<1x128xf32> to vector<8x128xf32>
    %6 = arith.addf %3, %5 : vector<8x128xf32>
    %cst_5 = arith.constant 0.000000e+00 : f32
    %7 = vector.broadcast %cst_5 : f32 to vector<8x128xf32>
    %8 = arith.maximumf %6, %7 : vector<8x128xf32>
    %9 = arith.truncf %8 : vector<8x128xf32> to vector<8x128xbf16>
    %c0_6 = arith.constant 0 : index
    %c0_7 = arith.constant 0 : index
    %10 = vector.load %arg5[%c0_6, %c0_7] : memref<128x128xbf16, #tpu.memory_space<vmem>>, vector<128x128xbf16>
    %cst_8 = arith.constant dense<0.000000e+00> : vector<8x128xf32>
    %11 = tpu.matmul %9, %10, %cst_8 {dimension_numbers = #tpu.dot_dimension_numbers<[1], [0], [0], [1], [0, 0, 1, 1], [], []>} : vector<8x128xbf16>, vector<128x128xbf16>, vector<8x128xf32> -> vector<8x128xf32>
    %c0_9 = arith.constant 0 : index
    %c0_10 = arith.constant 0 : index
    %12 = vector.load %arg6[%c0_9, %c0_10] : memref<1x128xf32, #tpu.memory_space<vmem>>, vector<1x128xf32>
    %13 = vector.broadcast %12 : vector<1x128xf32> to vector<8x128xf32>
    %14 = arith.addf %11, %13 : vector<8x128xf32>
    %cst_11 = arith.constant 0.000000e+00 : f32
    %15 = vector.broadcast %cst_11 : f32 to vector<8x128xf32>
    %16 = arith.maximumf %14, %15 : vector<8x128xf32>
    %17 = arith.truncf %16 : vector<8x128xf32> to vector<8x128xbf16>
    %c0_12 = arith.constant 0 : index
    %c0_13 = arith.constant 0 : index
    %18 = vector.load %arg7[%c0_12, %c0_13] : memref<128x128xbf16, #tpu.memory_space<vmem>>, vector<128x128xbf16>
    %cst_14 = arith.constant dense<0.000000e+00> : vector<8x128xf32>
    %19 = tpu.matmul %17, %18, %cst_14 {dimension_numbers = #tpu.dot_dimension_numbers<[1], [0], [0], [1], [0, 0, 1, 1], [], []>} : vector<8x128xbf16>, vector<128x128xbf16>, vector<8x128xf32> -> vector<8x128xf32>
    %c0_15 = arith.constant 0 : index
    %c0_16 = arith.constant 0 : index
    %20 = vector.load %arg2[%c0_15, %c0_16] : memref<8x8xf32, #tpu.memory_space<vmem>>, vector<8x8xf32>
    %21 = arith.truncf %20 : vector<8x8xf32> to vector<8x8xbf16>
    %c0_17 = arith.constant 0 : index
    %c0_18 = arith.constant 0 : index
    %22 = vector.load %arg8[%c0_17, %c0_18] : memref<8x128xbf16, #tpu.memory_space<vmem>>, vector<8x128xbf16>
    %cst_19 = arith.constant dense<0.000000e+00> : vector<8x128xf32>
    %23 = tpu.matmul %21, %22, %cst_19 {dimension_numbers = #tpu.dot_dimension_numbers<[1], [0], [0], [1], [0, 0, 1, 1], [], []>} : vector<8x8xbf16>, vector<8x128xbf16>, vector<8x128xf32> -> vector<8x128xf32>
    %24 = arith.addf %19, %23 : vector<8x128xf32>
    %c0_20 = arith.constant 0 : index
    %c0_21 = arith.constant 0 : index
    %25 = vector.load %arg9[%c0_20, %c0_21] : memref<1x128xf32, #tpu.memory_space<vmem>>, vector<1x128xf32>
    %26 = vector.broadcast %25 : vector<1x128xf32> to vector<8x128xf32>
    %27 = arith.addf %24, %26 : vector<8x128xf32>
    %cst_22 = arith.constant 0.000000e+00 : f32
    %28 = vector.broadcast %cst_22 : f32 to vector<8x128xf32>
    %29 = arith.maximumf %27, %28 : vector<8x128xf32>
    %30 = arith.truncf %29 : vector<8x128xf32> to vector<8x128xbf16>
    %c0_23 = arith.constant 0 : index
    %c0_24 = arith.constant 0 : index
    %31 = vector.load %arg10[%c0_23, %c0_24] : memref<128x128xbf16, #tpu.memory_space<vmem>>, vector<128x128xbf16>
    %cst_25 = arith.constant dense<0.000000e+00> : vector<8x128xf32>
    %32 = tpu.matmul %30, %31, %cst_25 {dimension_numbers = #tpu.dot_dimension_numbers<[1], [0], [0], [1], [0, 0, 1, 1], [], []>} : vector<8x128xbf16>, vector<128x128xbf16>, vector<8x128xf32> -> vector<8x128xf32>
    %c0_26 = arith.constant 0 : index
    %c0_27 = arith.constant 0 : index
    %33 = vector.load %arg11[%c0_26, %c0_27] : memref<1x128xf32, #tpu.memory_space<vmem>>, vector<1x128xf32>
    %34 = vector.broadcast %33 : vector<1x128xf32> to vector<8x128xf32>
    %35 = arith.addf %32, %34 : vector<8x128xf32>
    %cst_28 = arith.constant 0.000000e+00 : f32
    %36 = vector.broadcast %cst_28 : f32 to vector<8x128xf32>
    %37 = arith.maximumf %35, %36 : vector<8x128xf32>
    %38 = arith.truncf %37 : vector<8x128xf32> to vector<8x128xbf16>
    %c0_29 = arith.constant 0 : index
    %c0_30 = arith.constant 0 : index
    %39 = vector.load %arg12[%c0_29, %c0_30] : memref<128x128xbf16, #tpu.memory_space<vmem>>, vector<128x128xbf16>
    %cst_31 = arith.constant dense<0.000000e+00> : vector<8x128xf32>
    %40 = tpu.matmul %38, %39, %cst_31 {dimension_numbers = #tpu.dot_dimension_numbers<[1], [0], [0], [1], [0, 0, 1, 1], [], []>} : vector<8x128xbf16>, vector<128x128xbf16>, vector<8x128xf32> -> vector<8x128xf32>
    %c0_32 = arith.constant 0 : index
    %c0_33 = arith.constant 0 : index
    %41 = vector.load %arg13[%c0_32, %c0_33] : memref<1x128xf32, #tpu.memory_space<vmem>>, vector<1x128xf32>
    %42 = vector.broadcast %41 : vector<1x128xf32> to vector<8x128xf32>
    %43 = arith.addf %40, %42 : vector<8x128xf32>
    %cst_34 = arith.constant 0.000000e+00 : f32
    %44 = vector.broadcast %cst_34 : f32 to vector<8x128xf32>
    %45 = arith.maximumf %43, %44 : vector<8x128xf32>
    %46 = arith.truncf %45 : vector<8x128xf32> to vector<8x128xbf16>
    %c0_35 = arith.constant 0 : index
    %c0_36 = arith.constant 0 : index
    %47 = vector.load %arg14[%c0_35, %c0_36] : memref<128x16xbf16, #tpu.memory_space<vmem>>, vector<128x16xbf16>
    %cst_37 = arith.constant dense<0.000000e+00> : vector<8x16xf32>
    %48 = tpu.matmul %46, %47, %cst_37 {dimension_numbers = #tpu.dot_dimension_numbers<[1], [0], [0], [1], [0, 0, 1, 1], [], []>} : vector<8x128xbf16>, vector<128x16xbf16>, vector<8x16xf32> -> vector<8x16xf32>
    %c0_38 = arith.constant 0 : index
    %c0_39 = arith.constant 0 : index
    %49 = vector.load %arg15[%c0_38, %c0_39] : memref<1x16xf32, #tpu.memory_space<vmem>>, vector<1x16xf32>
    %50 = vector.broadcast %49 : vector<1x16xf32> to vector<8x16xf32>
    %51 = arith.addf %48, %50 : vector<8x16xf32>
    %cst_40 = arith.constant 0.000000e+00 : f32
    %52 = vector.broadcast %cst_40 : f32 to vector<8x16xf32>
    %53 = arith.maximumf %51, %52 : vector<8x16xf32>
    %c0_41 = arith.constant 0 : index
    %c0_42 = arith.constant 0 : index
    %54 = vector.load %arg16[%c0_41, %c0_42] : memref<8x16xf32, #tpu.memory_space<vmem>>, vector<8x16xf32>
    tpu.vector_store %arg16[%c0_41, %c0_42], %53 {strides = array<i32>} : memref<8x16xf32, #tpu.memory_space<vmem>>, vector<8x16xf32>,
    return
  }
  func.func @transform_0(%arg0: i32) -> (i32, i32) {
    %c0_i32 = arith.constant 0 : i32
    %c0_i32_0 = arith.constant 0 : i32
    return %arg0, %c0_i32 : i32, i32
  }
  func.func @transform_1(%arg0: i32) -> (i32, i32) {
    %c0_i32 = arith.constant 0 : i32
    %c0_i32_0 = arith.constant 0 : i32
    return %arg0, %c0_i32 : i32, i32
  }
  func.func @transform_2(%arg0: i32) -> (i32, i32) {
    %c0_i32 = arith.constant 0 : i32
    %c0_i32_0 = arith.constant 0 : i32
    %c0_i32_1 = arith.constant 0 : i32
    return %c0_i32, %c0_i32_0 : i32, i32
  }
  func.func @transform_3(%arg0: i32) -> (i32, i32) {
    %c0_i32 = arith.constant 0 : i32
    %c0_i32_0 = arith.constant 0 : i32
    %c0_i32_1 = arith.constant 0 : i32
    return %c0_i32, %c0_i32_0 : i32, i32
  }
  func.func @transform_4(%arg0: i32) -> (i32, i32) {
    %c0_i32 = arith.constant 0 : i32
    %c0_i32_0 = arith.constant 0 : i32
    %c0_i32_1 = arith.constant 0 : i32
    return %c0_i32, %c0_i32_0 : i32, i32
  }
  func.func @transform_5(%arg0: i32) -> (i32, i32) {
    %c0_i32 = arith.constant 0 : i32
    %c0_i32_0 = arith.constant 0 : i32
    %c0_i32_1 = arith.constant 0 : i32
    return %c0_i32, %c0_i32_0 : i32, i32
  }
  func.func @transform_6(%arg0: i32) -> (i32, i32) {
    %c0_i32 = arith.constant 0 : i32
    %c0_i32_0 = arith.constant 0 : i32
    %c0_i32_1 = arith.constant 0 : i32
    return %c0_i32, %c0_i32_0 : i32, i32
  }
  func.func @transform_7(%arg0: i32) -> (i32, i32) {
    %c0_i32 = arith.constant 0 : i32
    %c0_i32_0 = arith.constant 0 : i32
    %c0_i32_1 = arith.constant 0 : i32
    return %c0_i32, %c0_i32_0 : i32, i32
  }
  func.func @transform_8(%arg0: i32) -> (i32, i32) {
    %c0_i32 = arith.constant 0 : i32
    %c0_i32_0 = arith.constant 0 : i32
    %c0_i32_1 = arith.constant 0 : i32
    return %c0_i32, %c0_i32_0 : i32, i32
  }
  func.func @transform_9(%arg0: i32) -> (i32, i32) {
    %c0_i32 = arith.constant 0 : i32
    %c0_i32_0 = arith.constant 0 : i32
    %c0_i32_1 = arith.constant 0 : i32
    return %c0_i32, %c0_i32_0 : i32, i32
  }
  func.func @transform_10(%arg0: i32) -> (i32, i32) {
    %c0_i32 = arith.constant 0 : i32
    %c0_i32_0 = arith.constant 0 : i32
    %c0_i32_1 = arith.constant 0 : i32
    return %c0_i32, %c0_i32_0 : i32, i32
  }
  func.func @transform_11(%arg0: i32) -> (i32, i32) {
    %c0_i32 = arith.constant 0 : i32
    %c0_i32_0 = arith.constant 0 : i32
    %c0_i32_1 = arith.constant 0 : i32
    return %c0_i32, %c0_i32_0 : i32, i32
  }
  func.func @transform_12(%arg0: i32) -> (i32, i32) {
    %c0_i32 = arith.constant 0 : i32
    %c0_i32_0 = arith.constant 0 : i32
    %c0_i32_1 = arith.constant 0 : i32
    return %c0_i32, %c0_i32_0 : i32, i32
  }
  func.func @transform_13(%arg0: i32) -> (i32, i32) {
    %c0_i32 = arith.constant 0 : i32
    %c0_i32_0 = arith.constant 0 : i32
    %c0_i32_1 = arith.constant 0 : i32
    return %c0_i32, %c0_i32_0 : i32, i32
  }
  func.func @transform_14(%arg0: i32) -> (i32, i32) {
    %c0_i32 = arith.constant 0 : i32
    %c0_i32_0 = arith.constant 0 : i32
    %c0_i32_1 = arith.constant 0 : i32
    return %c0_i32, %c0_i32_0 : i32, i32
  }
  func.func @transform_15(%arg0: i32) -> (i32, i32) {
    %c0_i32 = arith.constant 0 : i32
    %c0_i32_0 = arith.constant 0 : i32
    return %arg0, %c0_i32 : i32, i32
  }
}

</mosaic_0001>

<llo_original>
// kernel: tpu_custom_call.1
$region0: #{tpu_custom_call.1}
  #allocation0 [shape = 'u32[]', space=smem, size = 0x4, offset = 0x4, fixed_abs, tag = 'smem constant byte address 0x4 - core index']
  #allocation1 [shape = 'u32[72,128]{1,0:T(1,128)}', space=vmem, size = 0x9000, scoped, tag = 'internal scratch']
  %s0 = inlined_call_operand.vmem [shape: f32[16,8], index: 0, kind: input, shape index: {}]
  %s1 = inlined_call_operand.vmem [shape: f32[16,8], index: 1, kind: input, shape index: {}]
  %s2 = inlined_call_operand.hbm [shape: bf16[8,128], index: 2, kind: input, shape index: {}]
  %s3 = inlined_call_operand.hbm [shape: f32[1,128], index: 3, kind: input, shape index: {}]
  %s4 = inlined_call_operand.vmem [shape: bf16[128,128], index: 4, kind: input, shape index: {}]
  %s5 = inlined_call_operand.hbm [shape: f32[1,128], index: 5, kind: input, shape index: {}]
  %s6 = inlined_call_operand.hbm [shape: bf16[128,128], index: 6, kind: input, shape index: {}]
  %s7 = inlined_call_operand.hbm [shape: bf16[8,128], index: 7, kind: input, shape index: {}]
  %s8 = inlined_call_operand.hbm [shape: f32[1,128], index: 8, kind: input, shape index: {}]
  %s9 = inlined_call_operand.vmem [shape: bf16[128,128], index: 9, kind: input, shape index: {}]
  %s10 = inlined_call_operand.vmem [shape: f32[1,128], index: 10, kind: input, shape index: {}]
  %s11 = inlined_call_operand.hbm [shape: bf16[128,128], index: 11, kind: input, shape index: {}]
  %s12 = inlined_call_operand.vmem [shape: f32[1,128], index: 12, kind: input, shape index: {}]
  %s13 = inlined_call_operand.vmem [shape: bf16[128,16], index: 13, kind: input, shape index: {}]
  %s14 = inlined_call_operand.vmem [shape: f32[1,16], index: 14, kind: input, shape index: {}]
  %s15 = inlined_call_operand.hbm [shape: f32[16,16], index: 15, kind: output, shape index: {}]
  %s16 = sld [smem:[#allocation0]]
  $region121: #{tpu_custom_call.1} parent=0
    _
  %s18 = ssub.s32 1, %s16
  %s19 = scalar_select 0, %s18, %s16
  $region1: #{tpu_custom_call.1} parent=0
    #allocation2 [shape = 'u8[2048]{0}', space=vmem, size = 0x800, scoped, tag = 'input window, operand 2, single buffered']
    #allocation3 [shape = 's32[2]{0}', space=sflag, size = 0x8, scoped, tag = 'scoped memory for tpu_custom_call.1']
    #allocation4 [shape = 's32[2]{0}', space=sflag, size = 0x8, scoped, tag = 'scoped memory for tpu_custom_call.1']
    #allocation5 [shape = 'u8[512]{0}', space=vmem, size = 0x400, scoped, tag = 'input window, operand 3, single buffered']
    #allocation6 [shape = 's32[1]{0}', space=sflag, size = 0x4, scoped, tag = 'scoped memory for tpu_custom_call.1']
    #allocation7 [shape = 'u8[512]{0}', space=vmem, size = 0x400, scoped, tag = 'input window, operand 5, single buffered']
    #allocation8 [shape = 'u8[32768]{0}', space=vmem, size = 0x8000, scoped, tag = 'input window, operand 6, single buffered']
    #allocation9 [shape = 's32[1]{0}', space=sflag, size = 0x4, scoped, tag = 'scoped memory for tpu_custom_call.1']
    #allocation10 [shape = 'u8[2048]{0}', space=vmem, size = 0x800, scoped, tag = 'input window, operand 7, single buffered']
    #allocation11 [shape = 'u8[512]{0}', space=vmem, size = 0x400, scoped, tag = 'input window, operand 8, single buffered']
    #allocation12 [shape = 's32[1]{0}', space=sflag, size = 0x4, scoped, tag = 'scoped memory for tpu_custom_call.1']
    #allocation13 [shape = 'u8[32768]{0}', space=vmem, size = 0x8000, scoped, tag = 'input window, operand 11, single buffered']
    #allocation14 [shape = 'u8[8192]{0}', space=vmem, size = 0x2000, scoped, tag = 'output window, operand 0']
    %20 = vsyncpa [#allocation3], 0
    %21 = vsyncpa [#allocation6], 0
    %22 = vsyncpa [#allocation9], 0
    %23 = vsyncpa [#allocation12], 0
    %24 = vsyncpa [#allocation4], 0
    %s25 = scalar_lea.sflag [#allocation4], 1
    %26 = vsyncpa %s25, 0
    loop: start=0, step=1, limit=4
    $region2: #{tpu_custom_call.1} parent=1 // loop_pre_header
      _
    $region3: #{tpu_custom_call.1} parent=1 // loop_header
      %s28 = sphi 0, %s32
      %p29 = scmp.ge.s32.totalorder %s28, 4
      %s38 = sphi 0, %s40
      %s41 = sphi 0, %s38
      %s42 = sphi 0, %s41
      %s58 = sphi 0, %s42
      %s64 = sphi 0, %s66
      %s67 = sphi 0, %s64
      %s68 = sphi 0, %s67
      %s84 = sphi 0, %s68
      %s88 = sphi 0, %s88
      %s90 = sphi 0, %s88
      %s91 = sphi 0, %s90
      %s105 = sphi 0, %s91
      %s109 = sphi 0, %s109
      %s111 = sphi 0, %s109
      %s112 = sphi 0, %s111
      %s126 = sphi 0, %s112
      %s130 = sphi 0, %s130
      %s132 = sphi 0, %s130
      %s133 = sphi 0, %s132
      %s147 = sphi 0, %s133
      %s151 = sphi 0, %s151
      %s153 = sphi 0, %s151
      %s154 = sphi 0, %s153
      %s168 = sphi 0, %s154
      %s172 = sphi 0, %s172
      %s174 = sphi 0, %s172
      %s175 = sphi 0, %s174
      %s189 = sphi 0, %s175
      %s193 = sphi 0, %s193
      %s195 = sphi 0, %s193
      %s196 = sphi 0, %s195
      %s210 = sphi 0, %s196
      %s214 = sphi 0, %s214
      %s216 = sphi 0, %s214
      %s217 = sphi 0, %s216
      %s231 = sphi 0, %s217
      %s235 = sphi 0, %s235
      %s237 = sphi 0, %s235
      %s238 = sphi 0, %s237
      %s252 = sphi 0, %s238
      %s256 = sphi 0, %s256
      %s258 = sphi 0, %s256
      %s259 = sphi 0, %s258
      %s273 = sphi 0, %s259
      %s277 = sphi 0, %s277
      %s279 = sphi 0, %s277
      %s280 = sphi 0, %s279
      %s294 = sphi 0, %s280
      %s298 = sphi 0, %s298
      %s300 = sphi 0, %s298
      %s301 = sphi 0, %s300
      %s315 = sphi 0, %s301
      %s319 = sphi 0, %s319
      %s321 = sphi 0, %s319
      %s322 = sphi 0, %s321
      %s336 = sphi 0, %s322
      %s340 = sphi 0, %s340
      %s342 = sphi 0, %s340
      %s343 = sphi 0, %s342
      %s357 = sphi 0, %s343
      %s363 = sphi 0, %s365
      %s366 = sphi 0, %s363
      %s367 = sphi 0, %s366
      %s383 = sphi 0, %s367
    $region4: #{tpu_custom_call.1} parent=1 // loop_header_branch
      %31 = sbr.rel (%p29) target = $region8
    $region5: #{tpu_custom_call.1} parent=1 // loop_body
      %s33 = ssub.s32 %s28, 1
      %s34 = ssub.s32 %s28, 2
      %s35 = sadd.s32 %s28, 1
      %s36 = ssub.s32 %s28, %s35
      %p37 = scmp.eq.s32.totalorder %s36, 0
      %s39 = sadd.s32 %s38, 1
      %s40 = scalar_select %p37, %s38, %s39
      %p43 = pneg %p37
      %p44 = scmp.eq.s32.totalorder %s28, 1
      %p45 = por %p43, %p44
      %p46 = scmp.ne.s32.totalorder %s38, %s41
      %p47 = scmp.eq.s32.totalorder %s28, 0
      %p48 = por %p46, %p47
      %p49 = scmp.ne.s32.totalorder %s38, %s41
      %p50 = scmp.eq.s32.totalorder %s33, 1
      %p51 = por %p49, %p50
      %p52 = scmp.ne.s32.totalorder %s41, %s42
      %p53 = scmp.eq.s32.totalorder %s33, 0
      %p54 = por %p52, %p53
      %p55 = scmp.ne.s32.totalorder %s41, %s42
      %p56 = scmp.eq.s32.totalorder %s34, 1
      %p57 = por %p55, %p56
      %p59 = scmp.ne.s32.totalorder %s42, %s58
      %p60 = scmp.eq.s32.totalorder %s34, 0
      %p61 = por %p59, %p60
      %s62 = ssub.s32 %s28, %s35
      %p63 = scmp.eq.s32.totalorder %s62, 0
      %s65 = sadd.s32 %s64, 1
      %s66 = scalar_select %p63, %s64, %s65
      %p69 = pneg %p63
      %p70 = scmp.eq.s32.totalorder %s28, 1
      %p71 = por %p69, %p70
      %p72 = scmp.ne.s32.totalorder %s64, %s67
      %p73 = scmp.eq.s32.totalorder %s28, 0
      %p74 = por %p72, %p73
      %p75 = scmp.ne.s32.totalorder %s64, %s67
      %p76 = scmp.eq.s32.totalorder %s33, 1
      %p77 = por %p75, %p76
      %p78 = scmp.ne.s32.totalorder %s67, %s68
      %p79 = scmp.eq.s32.totalorder %s33, 0
      %p80 = por %p78, %p79
      %p81 = scmp.ne.s32.totalorder %s67, %s68
      %p82 = scmp.eq.s32.totalorder %s34, 1
      %p83 = por %p81, %p82
      %p85 = scmp.ne.s32.totalorder %s68, %s84
      %p86 = scmp.eq.s32.totalorder %s34, 0
      %p87 = por %p85, %p86
      %s89 = sadd.s32 %s88, 1
      %p92 = scmp.eq.s32.totalorder %s28, 1
      %p93 = scmp.ne.s32.totalorder %s88, %s90
      %p94 = scmp.eq.s32.totalorder %s28, 0
      %p95 = por %p93, %p94
      %p96 = scmp.ne.s32.totalorder %s88, %s90
      %p97 = scmp.eq.s32.totalorder %s33, 1
      %p98 = por %p96, %p97
      %p99 = scmp.ne.s32.totalorder %s90, %s91
      %p100 = scmp.eq.s32.totalorder %s33, 0
      %p101 = por %p99, %p100
      %p102 = scmp.ne.s32.totalorder %s90, %s91
      %p103 = scmp.eq.s32.totalorder %s34, 1
      %p104 = por %p102, %p103
      %p106 = scmp.ne.s32.totalorder %s91, %s105
      %p107 = scmp.eq.s32.totalorder %s34, 0
      %p108 = por %p106, %p107
      %s110 = sadd.s32 %s109, 1
      %p113 = scmp.eq.s32.totalorder %s28, 1
      %p114 = scmp.ne.s32.totalorder %s109, %s111
      %p115 = scmp.eq.s32.totalorder %s28, 0
      %p116 = por %p114, %p115
      %p117 = scmp.ne.s32.totalorder %s109, %s111
      %p118 = scmp.eq.s32.totalorder %s33, 1
      %p119 = por %p117, %p118
      %p120 = scmp.ne.s32.totalorder %s111, %s112
      %p121 = scmp.eq.s32.totalorder %s33, 0
      %p122 = por %p120, %p121
      %p123 = scmp.ne.s32.totalorder %s111, %s112
      %p124 = scmp.eq.s32.totalorder %s34, 1
      %p125 = por %p123, %p124
      %p127 = scmp.ne.s32.totalorder %s112, %s126
      %p128 = scmp.eq.s32.totalorder %s34, 0
      %p129 = por %p127, %p128
      %s131 = sadd.s32 %s130, 1
      %p134 = scmp.eq.s32.totalorder %s28, 1
      %p135 = scmp.ne.s32.totalorder %s130, %s132
      %p136 = scmp.eq.s32.totalorder %s28, 0
      %p137 = por %p135, %p136
      %p138 = scmp.ne.s32.totalorder %s130, %s132
      %p139 = scmp.eq.s32.totalorder %s33, 1
      %p140 = por %p138, %p139
      %p141 = scmp.ne.s32.totalorder %s132, %s133
      %p142 = scmp.eq.s32.totalorder %s33, 0
      %p143 = por %p141, %p142
      %p144 = scmp.ne.s32.totalorder %s132, %s133
      %p145 = scmp.eq.s32.totalorder %s34, 1
      %p146 = por %p144, %p145
      %p148 = scmp.ne.s32.totalorder %s133, %s147
      %p149 = scmp.eq.s32.totalorder %s34, 0
      %p150 = por %p148, %p149
      %s152 = sadd.s32 %s151, 1
      %p155 = scmp.eq.s32.totalorder %s28, 1
      %p156 = scmp.ne.s32.totalorder %s151, %s153
      %p157 = scmp.eq.s32.totalorder %s28, 0
      %p158 = por %p156, %p157
      %p159 = scmp.ne.s32.totalorder %s151, %s153
      %p160 = scmp.eq.s32.totalorder %s33, 1
      %p161 = por %p159, %p160
      %p162 = scmp.ne.s32.totalorder %s153, %s154
      %p163 = scmp.eq.s32.totalorder %s33, 0
      %p164 = por %p162, %p163
      %p165 = scmp.ne.s32.totalorder %s153, %s154
      %p166 = scmp.eq.s32.totalorder %s34, 1
      %p167 = por %p165, %p166
      %p169 = scmp.ne.s32.totalorder %s154, %s168
      %p170 = scmp.eq.s32.totalorder %s34, 0
      %p171 = por %p169, %p170
      %s173 = sadd.s32 %s172, 1
      %p176 = scmp.eq.s32.totalorder %s28, 1
      %p177 = scmp.ne.s32.totalorder %s172, %s174
      %p178 = scmp.eq.s32.totalorder %s28, 0
      %p179 = por %p177, %p178
      %p180 = scmp.ne.s32.totalorder %s172, %s174
      %p181 = scmp.eq.s32.totalorder %s33, 1
      %p182 = por %p180, %p181
      %p183 = scmp.ne.s32.totalorder %s174, %s175
      %p184 = scmp.eq.s32.totalorder %s33, 0
      %p185 = por %p183, %p184
      %p186 = scmp.ne.s32.totalorder %s174, %s175
      %p187 = scmp.eq.s32.totalorder %s34, 1
      %p188 = por %p186, %p187
      %p190 = scmp.ne.s32.totalorder %s175, %s189
      %p191 = scmp.eq.s32.totalorder %s34, 0
      %p192 = por %p190, %p191
      %s194 = sadd.s32 %s193, 1
      %p197 = scmp.eq.s32.totalorder %s28, 1
      %p198 = scmp.ne.s32.totalorder %s193, %s195
      %p199 = scmp.eq.s32.totalorder %s28, 0
      %p200 = por %p198, %p199
      %p201 = scmp.ne.s32.totalorder %s193, %s195
      %p202 = scmp.eq.s32.totalorder %s33, 1
      %p203 = por %p201, %p202
      %p204 = scmp.ne.s32.totalorder %s195, %s196
      %p205 = scmp.eq.s32.totalorder %s33, 0
      %p206 = por %p204, %p205
      %p207 = scmp.ne.s32.totalorder %s195, %s196
      %p208 = scmp.eq.s32.totalorder %s34, 1
      %p209 = por %p207, %p208
      %p211 = scmp.ne.s32.totalorder %s196, %s210
      %p212 = scmp.eq.s32.totalorder %s34, 0
      %p213 = por %p211, %p212
      %s215 = sadd.s32 %s214, 1
      %p218 = scmp.eq.s32.totalorder %s28, 1
      %p219 = scmp.ne.s32.totalorder %s214, %s216
      %p220 = scmp.eq.s32.totalorder %s28, 0
      %p221 = por %p219, %p220
      %p222 = scmp.ne.s32.totalorder %s214, %s216
      %p223 = scmp.eq.s32.totalorder %s33, 1
      %p224 = por %p222, %p223
      %p225 = scmp.ne.s32.totalorder %s216, %s217
      %p226 = scmp.eq.s32.totalorder %s33, 0
      %p227 = por %p225, %p226
      %p228 = scmp.ne.s32.totalorder %s216, %s217
      %p229 = scmp.eq.s32.totalorder %s34, 1
      %p230 = por %p228, %p229
      %p232 = scmp.ne.s32.totalorder %s217, %s231
      %p233 = scmp.eq.s32.totalorder %s34, 0
      %p234 = por %p232, %p233
      %s236 = sadd.s32 %s235, 1
      %p239 = scmp.eq.s32.totalorder %s28, 1
      %p240 = scmp.ne.s32.totalorder %s235, %s237
      %p241 = scmp.eq.s32.totalorder %s28, 0
      %p242 = por %p240, %p241
      %p243 = scmp.ne.s32.totalorder %s235, %s237
      %p244 = scmp.eq.s32.totalorder %s33, 1
      %p245 = por %p243, %p244
      %p246 = scmp.ne.s32.totalorder %s237, %s238
      %p247 = scmp.eq.s32.totalorder %s33, 0
      %p248 = por %p246, %p247
      %p249 = scmp.ne.s32.totalorder %s237, %s238
      %p250 = scmp.eq.s32.totalorder %s34, 1
      %p251 = por %p249, %p250
      %p253 = scmp.ne.s32.totalorder %s238, %s252
      %p254 = scmp.eq.s32.totalorder %s34, 0
      %p255 = por %p253, %p254
      %s257 = sadd.s32 %s256, 1
      %p260 = scmp.eq.s32.totalorder %s28, 1
      %p261 = scmp.ne.s32.totalorder %s256, %s258
      %p262 = scmp.eq.s32.totalorder %s28, 0
      %p263 = por %p261, %p262
      %p264 = scmp.ne.s32.totalorder %s256, %s258
      %p265 = scmp.eq.s32.totalorder %s33, 1
      %p266 = por %p264, %p265
      %p267 = scmp.ne.s32.totalorder %s258, %s259
      %p268 = scmp.eq.s32.totalorder %s33, 0
      %p269 = por %p267, %p268
      %p270 = scmp.ne.s32.totalorder %s258, %s259
      %p271 = scmp.eq.s32.totalorder %s34, 1
      %p272 = por %p270, %p271
      %p274 = scmp.ne.s32.totalorder %s259, %s273
      %p275 = scmp.eq.s32.totalorder %s34, 0
      %p276 = por %p274, %p275
      %s278 = sadd.s32 %s277, 1
      %p281 = scmp.eq.s32.totalorder %s28, 1
      %p282 = scmp.ne.s32.totalorder %s277, %s279
      %p283 = scmp.eq.s32.totalorder %s28, 0
      %p284 = por %p282, %p283
      %p285 = scmp.ne.s32.totalorder %s277, %s279
      %p286 = scmp.eq.s32.totalorder %s33, 1
      %p287 = por %p285, %p286
      %p288 = scmp.ne.s32.totalorder %s279, %s280
      %p289 = scmp.eq.s32.totalorder %s33, 0
      %p290 = por %p288, %p289
      %p291 = scmp.ne.s32.totalorder %s279, %s280
      %p292 = scmp.eq.s32.totalorder %s34, 1
      %p293 = por %p291, %p292
      %p295 = scmp.ne.s32.totalorder %s280, %s294
      %p296 = scmp.eq.s32.totalorder %s34, 0
      %p297 = por %p295, %p296
      %s299 = sadd.s32 %s298, 1
      %p302 = scmp.eq.s32.totalorder %s28, 1
      %p303 = scmp.ne.s32.totalorder %s298, %s300
      %p304 = scmp.eq.s32.totalorder %s28, 0
      %p305 = por %p303, %p304
      %p306 = scmp.ne.s32.totalorder %s298, %s300
      %p307 = scmp.eq.s32.totalorder %s33, 1
      %p308 = por %p306, %p307
      %p309 = scmp.ne.s32.totalorder %s300, %s301
      %p310 = scmp.eq.s32.totalorder %s33, 0
      %p311 = por %p309, %p310
      %p312 = scmp.ne.s32.totalorder %s300, %s301
      %p313 = scmp.eq.s32.totalorder %s34, 1
      %p314 = por %p312, %p313
      %p316 = scmp.ne.s32.totalorder %s301, %s315
      %p317 = scmp.eq.s32.totalorder %s34, 0
      %p318 = por %p316, %p317
      %s320 = sadd.s32 %s319, 1
      %p323 = scmp.eq.s32.totalorder %s28, 1
      %p324 = scmp.ne.s32.totalorder %s319, %s321
      %p325 = scmp.eq.s32.totalorder %s28, 0
      %p326 = por %p324, %p325
      %p327 = scmp.ne.s32.totalorder %s319, %s321
      %p328 = scmp.eq.s32.totalorder %s33, 1
      %p329 = por %p327, %p328
      %p330 = scmp.ne.s32.totalorder %s321, %s322
      %p331 = scmp.eq.s32.totalorder %s33, 0
      %p332 = por %p330, %p331
      %p333 = scmp.ne.s32.totalorder %s321, %s322
      %p334 = scmp.eq.s32.totalorder %s34, 1
      %p335 = por %p333, %p334
      %p337 = scmp.ne.s32.totalorder %s322, %s336
      %p338 = scmp.eq.s32.totalorder %s34, 0
      %p339 = por %p337, %p338
      %s341 = sadd.s32 %s340, 1
      %p344 = scmp.eq.s32.totalorder %s28, 1
      %p345 = scmp.ne.s32.totalorder %s340, %s342
      %p346 = scmp.eq.s32.totalorder %s28, 0
      %p347 = por %p345, %p346
      %p348 = scmp.ne.s32.totalorder %s340, %s342
      %p349 = scmp.eq.s32.totalorder %s33, 1
      %p350 = por %p348, %p349
      %p351 = scmp.ne.s32.totalorder %s342, %s343
      %p352 = scmp.eq.s32.totalorder %s33, 0
      %p353 = por %p351, %p352
      %p354 = scmp.ne.s32.totalorder %s342, %s343
      %p355 = scmp.eq.s32.totalorder %s34, 1
      %p356 = por %p354, %p355
      %p358 = scmp.ne.s32.totalorder %s343, %s357
      %p359 = scmp.eq.s32.totalorder %s34, 0
      %p360 = por %p358, %p359
      %s361 = ssub.s32 %s28, %s35
      %p362 = scmp.eq.s32.totalorder %s361, 0
      %s364 = sadd.s32 %s363, 1
      %s365 = scalar_select %p362, %s363, %s364
      %p368 = pneg %p362
      %p369 = scmp.eq.s32.totalorder %s28, 1
      %p370 = por %p368, %p369
      %p371 = scmp.ne.s32.totalorder %s363, %s366
      %p372 = scmp.eq.s32.totalorder %s28, 0
      %p373 = por %p371, %p372
      %p374 = scmp.ne.s32.totalorder %s363, %s366
      %p375 = scmp.eq.s32.totalorder %s33, 1
      %p376 = por %p374, %p375
      %p377 = scmp.ne.s32.totalorder %s366, %s367
      %p378 = scmp.eq.s32.totalorder %s33, 0
      %p379 = por %p377, %p378
      %p380 = scmp.ne.s32.totalorder %s366, %s367
      %p381 = scmp.eq.s32.totalorder %s34, 1
      %p382 = por %p380, %p381
      %p384 = scmp.ne.s32.totalorder %s367, %s383
      %p385 = scmp.eq.s32.totalorder %s34, 0
      %p386 = por %p384, %p385
      %p387 = scmp.le.s32.totalorder 1, %s28
      %p388 = scmp.lt.s32.totalorder %s28, 3
      %p389 = pnand %p387, %p388
      %p390 = pneg %p389
      // Predicated region
      $region9: #{tpu_custom_call.1} parent=5 // pred_check
        _
      $region10: #{tpu_custom_call.1} parent=5 // pred_check_branch
        %392 = sbr.rel (%p389) target = $region12
      $region11: #{tpu_custom_call.1} parent=5 // pred_region
        %s393 = ssub.s32 %s28, 1
        // Predicated region
        $region13: #{tpu_custom_call.1} parent=11 // pred_check
          %p394 = pneg %p101
        $region14: #{tpu_custom_call.1} parent=11 // pred_check_branch
          %396 = sbr.rel (%p394) target = $region16
        $region15: #{tpu_custom_call.1} parent=11 // pred_region
          %398 = vsyncadd [#allocation3], 0
          %s400 = sshll.u32 %s2, 4
          %s401 = int_to_ptr.hbm [resolvable:$true] %s400
          %s402 = sshll.u32 [#allocation2], 4
          %s403 = int_to_ptr.vmem [resolvable:$true] %s402
          %405 = dma.hbm_to_vmem [thread:$0]  %s401, 64, %s403, [#allocation3]
        $region16: #{tpu_custom_call.1} parent=11 // pred_fallthru
          _
        // Predicated region
        $region17: #{tpu_custom_call.1} parent=11 // pred_check
          %p406 = pneg %p122
        $region18: #{tpu_custom_call.1} parent=11 // pred_check_branch
          %408 = sbr.rel (%p406) target = $region20
        $region19: #{tpu_custom_call.1} parent=11 // pred_region
          %410 = vsyncadd [#allocation6], 0
          %s412 = sshll.u32 %s3, 4
          %s413 = int_to_ptr.hbm [resolvable:$true] %s412
          %s414 = sshll.u32 [#allocation5], 4
          %s415 = int_to_ptr.vmem [resolvable:$true] %s414
          %417 = dma.hbm_to_vmem [thread:$0]  %s413, 16, %s415, [#allocation6]
        $region20: #{tpu_custom_call.1} parent=11 // pred_fallthru
          _
        // Predicated region
        $region21: #{tpu_custom_call.1} parent=11 // pred_check
          %p418 = pneg %p143
        $region22: #{tpu_custom_call.1} parent=11 // pred_check_branch
          %420 = sbr.rel (%p418) target = $region24
        $region23: #{tpu_custom_call.1} parent=11 // pred_region
          _
        $region24: #{tpu_custom_call.1} parent=11 // pred_fallthru
          _
        // Predicated region
        $region25: #{tpu_custom_call.1} parent=11 // pred_check
          %p421 = pneg %p164
        $region26: #{tpu_custom_call.1} parent=11 // pred_check_branch
          %423 = sbr.rel (%p421) target = $region28
        $region27: #{tpu_custom_call.1} parent=11 // pred_region
          %425 = vsyncadd [#allocation6], 0
          %s427 = sshll.u32 %s5, 4
          %s428 = int_to_ptr.hbm [resolvable:$true] %s427
          %s429 = sshll.u32 [#allocation7], 4
          %s430 = int_to_ptr.vmem [resolvable:$true] %s429
          %432 = dma.hbm_to_vmem [thread:$0]  %s428, 16, %s430, [#allocation6]
        $region28: #{tpu_custom_call.1} parent=11 // pred_fallthru
          _
        // Predicated region
        $region29: #{tpu_custom_call.1} parent=11 // pred_check
          %p433 = pneg %p185
        $region30: #{tpu_custom_call.1} parent=11 // pred_check_branch
          %435 = sbr.rel (%p433) target = $region32
        $region31: #{tpu_custom_call.1} parent=11 // pred_region
          %437 = vsyncadd [#allocation9], 0
          %s438 = sshll.u32 %s6, 4
          %s439 = int_to_ptr.hbm [resolvable:$true] %s438
          %s440 = sshll.u32 [#allocation8], 4
          %s441 = int_to_ptr.vmem [resolvable:$true] %s440
          %446 = dma.hbm_to_vmem [thread:$0]  %s439, 1024, %s441, [#allocation9], 64, 64, 4
        $region32: #{tpu_custom_call.1} parent=11 // pred_fallthru
          _
        // Predicated region
        $region33: #{tpu_custom_call.1} parent=11 // pred_check
          %p447 = pneg %p206
        $region34: #{tpu_custom_call.1} parent=11 // pred_check_branch
          %449 = sbr.rel (%p447) target = $region36
        $region35: #{tpu_custom_call.1} parent=11 // pred_region
          %451 = vsyncadd [#allocation9], 0
          %s453 = sshll.u32 %s7, 4
          %s454 = int_to_ptr.hbm [resolvable:$true] %s453
          %s455 = sshll.u32 [#allocation10], 4
          %s456 = int_to_ptr.vmem [resolvable:$true] %s455
          %458 = dma.hbm_to_vmem [thread:$0]  %s454, 64, %s456, [#allocation9]
        $region36: #{tpu_custom_call.1} parent=11 // pred_fallthru
          _
        // Predicated region
        $region37: #{tpu_custom_call.1} parent=11 // pred_check
          %p459 = pneg %p227
        $region38: #{tpu_custom_call.1} parent=11 // pred_check_branch
          %461 = sbr.rel (%p459) target = $region40
        $region39: #{tpu_custom_call.1} parent=11 // pred_region
          %463 = vsyncadd [#allocation12], 0
          %s465 = sshll.u32 %s8, 4
          %s466 = int_to_ptr.hbm [resolvable:$true] %s465
          %s467 = sshll.u32 [#allocation11], 4
          %s468 = int_to_ptr.vmem [resolvable:$true] %s467
          %470 = dma.hbm_to_vmem [thread:$0]  %s466, 16, %s468, [#allocation12]
        $region40: #{tpu_custom_call.1} parent=11 // pred_fallthru
          _
        // Predicated region
        $region41: #{tpu_custom_call.1} parent=11 // pred_check
          %p471 = pneg %p248
        $region42: #{tpu_custom_call.1} parent=11 // pred_check_branch
          %473 = sbr.rel (%p471) target = $region44
        $region43: #{tpu_custom_call.1} parent=11 // pred_region
          _
        $region44: #{tpu_custom_call.1} parent=11 // pred_fallthru
          _
        // Predicated region
        $region45: #{tpu_custom_call.1} parent=11 // pred_check
          %p474 = pneg %p269
        $region46: #{tpu_custom_call.1} parent=11 // pred_check_branch
          %476 = sbr.rel (%p474) target = $region48
        $region47: #{tpu_custom_call.1} parent=11 // pred_region
          _
        $region48: #{tpu_custom_call.1} parent=11 // pred_fallthru
          _
        // Predicated region
        $region49: #{tpu_custom_call.1} parent=11 // pred_check
          %p477 = pneg %p290
        $region50: #{tpu_custom_call.1} parent=11 // pred_check_branch
          %479 = sbr.rel (%p477) target = $region52
        $region51: #{tpu_custom_call.1} parent=11 // pred_region
          %481 = vsyncadd [#allocation12], 0
          %s482 = sshll.u32 %s11, 4
          %s483 = int_to_ptr.hbm [resolvable:$true] %s482
          %s484 = sshll.u32 [#allocation13], 4
          %s485 = int_to_ptr.vmem [resolvable:$true] %s484
          %490 = dma.hbm_to_vmem [thread:$0]  %s483, 1024, %s485, [#allocation12], 64, 64, 4
        $region52: #{tpu_custom_call.1} parent=11 // pred_fallthru
          _
        // Predicated region
        $region53: #{tpu_custom_call.1} parent=11 // pred_check
          %p491 = pneg %p311
        $region54: #{tpu_custom_call.1} parent=11 // pred_check_branch
          %493 = sbr.rel (%p491) target = $region56
        $region55: #{tpu_custom_call.1} parent=11 // pred_region
          _
        $region56: #{tpu_custom_call.1} parent=11 // pred_fallthru
          _
        // Predicated region
        $region57: #{tpu_custom_call.1} parent=11 // pred_check
          %p494 = pneg %p332
        $region58: #{tpu_custom_call.1} parent=11 // pred_check_branch
          %496 = sbr.rel (%p494) target = $region60
        $region59: #{tpu_custom_call.1} parent=11 // pred_region
          _
        $region60: #{tpu_custom_call.1} parent=11 // pred_fallthru
          _
        // Predicated region
        $region61: #{tpu_custom_call.1} parent=11 // pred_check
          %p497 = pneg %p353
        $region62: #{tpu_custom_call.1} parent=11 // pred_check_branch
          %499 = sbr.rel (%p497) target = $region64
        $region63: #{tpu_custom_call.1} parent=11 // pred_region
          _
        $region64: #{tpu_custom_call.1} parent=11 // pred_fallthru
          _
      $region12: #{tpu_custom_call.1} parent=5 // pred_fallthru
        _
      %p500 = scmp.lt.s32.totalorder %s28, 2
      // Predicated region
      $region65: #{tpu_custom_call.1} parent=5 // pred_check
        %p501 = pneg %p500
      $region66: #{tpu_custom_call.1} parent=5 // pred_check_branch
        %503 = sbr.rel (%p501) target = $region68
      $region67: #{tpu_custom_call.1} parent=5 // pred_region
        // Predicated region
        $region69: #{tpu_custom_call.1} parent=67 // pred_check
          %p504 = pneg %p48
        $region70: #{tpu_custom_call.1} parent=67 // pred_check_branch
          %506 = sbr.rel (%p504) target = $region72
        $region71: #{tpu_custom_call.1} parent=67 // pred_region
          %p507 = scmp.lt.s32.totalorder %s28, 1
          %s508 = scalar_select %p507, %s28, 1
          %s509 = smul.addr %s508, 8
          %s510 = scalar_lea.vmem %s0, %s509
        $region72: #{tpu_custom_call.1} parent=67 // pred_fallthru
          _
        // Predicated region
        $region73: #{tpu_custom_call.1} parent=67 // pred_check
          %p511 = pneg %p74
        $region74: #{tpu_custom_call.1} parent=67 // pred_check_branch
          %513 = sbr.rel (%p511) target = $region76
        $region75: #{tpu_custom_call.1} parent=67 // pred_region
          %p514 = scmp.lt.s32.totalorder %s28, 1
          %s515 = scalar_select %p514, %s28, 1
          %s516 = smul.addr %s515, 8
          %s517 = scalar_lea.vmem %s1, %s516
        $region76: #{tpu_custom_call.1} parent=67 // pred_fallthru
          _
      $region68: #{tpu_custom_call.1} parent=5 // pred_fallthru
        _
      %p518 = scmp.le.s32.totalorder 1, %s28
      %p519 = scmp.lt.s32.totalorder %s28, 3
      %p520 = pnand %p518, %p519
      %p521 = pneg %p520
      // Predicated region
      $region77: #{tpu_custom_call.1} parent=5 // pred_check
        _
      $region78: #{tpu_custom_call.1} parent=5 // pred_check_branch
        %523 = sbr.rel (%p520) target = $region80
      $region79: #{tpu_custom_call.1} parent=5 // pred_region
        %s524 = ssub.s32 %s28, 1
        // Predicated region
        $region81: #{tpu_custom_call.1} parent=79 // pred_check
          %p525 = pneg %p101
        $region82: #{tpu_custom_call.1} parent=79 // pred_check_branch
          %527 = sbr.rel (%p525) target = $region84
        $region83: #{tpu_custom_call.1} parent=79 // pred_region
          %529 = dma.done [#allocation3], 64
        $region84: #{tpu_custom_call.1} parent=79 // pred_fallthru
          _
        // Predicated region
        $region85: #{tpu_custom_call.1} parent=79 // pred_check
          %p530 = pneg %p122
        $region86: #{tpu_custom_call.1} parent=79 // pred_check_branch
          %532 = sbr.rel (%p530) target = $region88
        $region87: #{tpu_custom_call.1} parent=79 // pred_region
          %534 = dma.done [#allocation6], 16
        $region88: #{tpu_custom_call.1} parent=79 // pred_fallthru
          _
        // Predicated region
        $region89: #{tpu_custom_call.1} parent=79 // pred_check
          %p535 = pneg %p164
        $region90: #{tpu_custom_call.1} parent=79 // pred_check_branch
          %537 = sbr.rel (%p535) target = $region92
        $region91: #{tpu_custom_call.1} parent=79 // pred_region
          %539 = dma.done [#allocation6], 16
        $region92: #{tpu_custom_call.1} parent=79 // pred_fallthru
          _
        // Predicated region
        $region93: #{tpu_custom_call.1} parent=79 // pred_check
          %p540 = pneg %p185
        $region94: #{tpu_custom_call.1} parent=79 // pred_check_branch
          %542 = sbr.rel (%p540) target = $region96
        $region95: #{tpu_custom_call.1} parent=79 // pred_region
          %544 = dma.done [#allocation9], 1024
        $region96: #{tpu_custom_call.1} parent=79 // pred_fallthru
          _
        // Predicated region
        $region97: #{tpu_custom_call.1} parent=79 // pred_check
          %p545 = pneg %p206
        $region98: #{tpu_custom_call.1} parent=79 // pred_check_branch
          %547 = sbr.rel (%p545) target = $region100
        $region99: #{tpu_custom_call.1} parent=79 // pred_region
          %549 = dma.done [#allocation9], 64
        $region100: #{tpu_custom_call.1} parent=79 // pred_fallthru
          _
        // Predicated region
        $region101: #{tpu_custom_call.1} parent=79 // pred_check
          %p550 = pneg %p227
        $region102: #{tpu_custom_call.1} parent=79 // pred_check_branch
          %552 = sbr.rel (%p550) target = $region104
        $region103: #{tpu_custom_call.1} parent=79 // pred_region
          %554 = dma.done [#allocation12], 16
        $region104: #{tpu_custom_call.1} parent=79 // pred_fallthru
          _
        // Predicated region
        $region105: #{tpu_custom_call.1} parent=79 // pred_check
          %p555 = pneg %p290
        $region106: #{tpu_custom_call.1} parent=79 // pred_check_branch
          %557 = sbr.rel (%p555) target = $region108
        $region107: #{tpu_custom_call.1} parent=79 // pred_region
          %559 = dma.done [#allocation12], 1024
        $region108: #{tpu_custom_call.1} parent=79 // pred_fallthru
          _
        %p560 = scmp.lt.s32.totalorder %s33, 1
        %s561 = scalar_select %p560, %s33, 1
        %s562 = smul.addr %s561, 8
        %s563 = scalar_lea.vmem %s0, %s562
        %p564 = pneg %p54
        %p565 = pneg %p51
        %p566 = scmp.lt.s32.totalorder %s33, 1
        %s567 = scalar_select %p566, %s33, 1
        %s568 = smul.addr %s567, 8
        %s569 = scalar_lea.vmem %s1, %s568
        %p570 = pneg %p80
        %p571 = pneg %p77
        %p572 = pneg %p101
        %p573 = pneg %p98
        %p574 = pneg %p122
        %p575 = pneg %p119
        %p576 = pneg %p143
        %p577 = pneg %p140
        %p578 = pneg %p164
        %p579 = pneg %p161
        %p580 = pneg %p185
        %p581 = pneg %p182
        %p582 = pneg %p206
        %p583 = pneg %p203
        %p584 = pneg %p227
        %p585 = pneg %p224
        %p586 = pneg %p248
        %p587 = pneg %p245
        %p588 = pneg %p269
        %p589 = pneg %p266
        %p590 = pneg %p290
        %p591 = pneg %p287
        %p592 = pneg %p311
        %p593 = pneg %p308
        %p594 = pneg %p332
        %p595 = pneg %p329
        %p596 = pneg %p353
        %p597 = pneg %p350
        %p598 = pneg %p379
        %p599 = pneg %p376
        %s600 = sand.u32 %s366, 1
        %s601 = scalar_lea.sflag [#allocation4], %s600
        %s602 = sand.u32 %s366, 1
        %s603 = smul.addr %s602, 8
        %s604 = scalar_lea.vmem [#allocation14], %s603
        %p605 = scmp.lt.s32.totalorder %s33, 1
        %s606 = scalar_select %p605, %s33, 1
        %s607 = smul.addr %s606, 8
        %s608 = scalar_lea.vmem %s0, %s607
        %p609 = scmp.lt.s32.totalorder %s33, 1
        %s610 = scalar_select %p609, %s33, 1
        %s611 = smul.addr %s610, 8
        %s612 = scalar_lea.vmem %s1, %s611
        %v614 = vld [vmem:[%s608] sm:$0xff]
        %v615 = vpack.c.bf16 %v614, %v614
        %v616 = vld [vmem:[#allocation2] sm:$0xf]
        %v617 = vld [vmem:[#allocation5] sm:$0x1]
        %v619 = vperm.slane %v617, 0
        %vm621 = vcmask 64512
        %v623 = vsel %vm621, %v615, 0
        %vm625 = vcmask 1043456
        %v627 = vsel %vm625, %v616, 0
        %629 = vmatpush.bf16.msra.mxu0 0
        %630 = vmatpush.bf16.msra.mxu0 0
        %631 = vmatpush.bf16.msra.mxu0 0
        %632 = vmatpush.bf16.msra.mxu0 0
        %633 = vmatpush.bf16.msra.mxu0 0
        %634 = vmatpush.bf16.msra.mxu0 0
        %635 = vmatpush.bf16.msra.mxu0 0
        %636 = vmatpush.bf16.msra.mxu0 %v627
        %637 = vmatmul.bf16.gmra.mxu0 %v623
        %v638 = vpop.f32.mrf.mxu0
        %v639 = vadd.f32 %v619, %v638
        %v640 = vpop.f32.mrf.mxu0
        %641 = vdwg.mxu0
        %v642 = vmax.f32 %v639, 0.0
        %v643 = vpack.c.bf16 %v642, %v642
        %v644 = vld [vmem:[%s4] sm:$0xf]
        %v645 = vld [vmem:[%s4 + $0x4] sm:$0xf]
        %v646 = vld [vmem:[%s4 + $0x8] sm:$0xf]
        %v647 = vld [vmem:[%s4 + $0xc] sm:$0xf]
        %v648 = vld [vmem:[%s4 + $0x10] sm:$0xf]
        %v649 = vld [vmem:[%s4 + $0x14] sm:$0xf]
        %v650 = vld [vmem:[%s4 + $0x18] sm:$0xf]
        %v651 = vld [vmem:[%s4 + $0x1c] sm:$0xf]
        %v652 = vld [vmem:[%s4 + $0x20] sm:$0xf]
        %v653 = vld [vmem:[%s4 + $0x24] sm:$0xf]
        %v654 = vld [vmem:[%s4 + $0x28] sm:$0xf]
        %v655 = vld [vmem:[%s4 + $0x2c] sm:$0xf]
        %v656 = vld [vmem:[%s4 + $0x30] sm:$0xf]
        %v657 = vld [vmem:[%s4 + $0x34] sm:$0xf]
        %v658 = vld [vmem:[%s4 + $0x38] sm:$0xf]
        %v659 = vld [vmem:[%s4 + $0x3c] sm:$0xf]
        %v660 = vld [vmem:[#allocation7] sm:$0x1]
        %v662 = vperm.slane %v660, 0
        %v680 = vunpack.c.l.b16 %v644
        %v681 = vunpack.c.l.b16 %v645
        %v682 = vunpack.c.l.b16 %v646
        %v683 = vunpack.c.l.b16 %v647
        %v684 = vunpack.c.l.b16 %v648
        %v685 = vunpack.c.l.b16 %v649
        %v686 = vunpack.c.l.b16 %v650
        %v687 = vunpack.c.l.b16 %v651
        %v688 = vunpack.c.l.b16 %v652
        %v689 = vunpack.c.l.b16 %v653
        %v690 = vunpack.c.l.b16 %v654
        %v691 = vunpack.c.l.b16 %v655
        %v692 = vunpack.c.l.b16 %v656
        %v693 = vunpack.c.l.b16 %v657
        %v694 = vunpack.c.l.b16 %v658
        %v695 = vunpack.c.l.b16 %v659
        %v696 = vpack.c.b16 %v681, %v680
        %v697 = vpack.c.b16 %v683, %v682
        %v698 = vpack.c.b16 %v685, %v684
        %v699 = vpack.c.b16 %v687, %v686
        %v700 = vpack.c.b16 %v689, %v688
        %v701 = vpack.c.b16 %v691, %v690
        %v702 = vpack.c.b16 %v693, %v692
        %v703 = vpack.c.b16 %v695, %v694
        %712 = vmatpush.bf16.msra.mxu0 %v703
        %713 = vmatpush.bf16.msra.mxu0 %v702
        %714 = vmatpush.bf16.msra.mxu0 %v701
        %715 = vmatpush.bf16.msra.mxu0 %v700
        %716 = vmatpush.bf16.msra.mxu0 %v699
        %717 = vmatpush.bf16.msra.mxu0 %v698
        %718 = vmatpush.bf16.msra.mxu0 %v697
        %719 = vmatpush.bf16.msra.mxu0 %v696
        %720 = vmatmul.bf16.gmra.mxu0 %v643
        %v721 = vpop.f32.mrf.mxu0
        %v722 = vadd.f32 %v662, %v721
        %v723 = vpop.f32.mrf.mxu0
        %724 = vdwg.mxu0
        %v725 = vmax.f32 %v722, 0.0
        %v726 = vpack.c.bf16 %v725, %v725
        %v727 = vld [vmem:[#allocation8] sm:$0xf]
        %v728 = vld [vmem:[#allocation8 + $0x4] sm:$0xf]
        %v729 = vld [vmem:[#allocation8 + $0x8] sm:$0xf]
        %v730 = vld [vmem:[#allocation8 + $0xc] sm:$0xf]
        %v731 = vld [vmem:[#allocation8 + $0x10] sm:$0xf]
        %v732 = vld [vmem:[#allocation8 + $0x14] sm:$0xf]
        %v733 = vld [vmem:[#allocation8 + $0x18] sm:$0xf]
        %v734 = vld [vmem:[#allocation8 + $0x1c] sm:$0xf]
        %v735 = vld [vmem:[#allocation8 + $0x20] sm:$0xf]
        %v736 = vld [vmem:[#allocation8 + $0x24] sm:$0xf]
        %v737 = vld [vmem:[#allocation8 + $0x28] sm:$0xf]
        %v738 = vld [vmem:[#allocation8 + $0x2c] sm:$0xf]
        %v739 = vld [vmem:[#allocation8 + $0x30] sm:$0xf]
        %v740 = vld [vmem:[#allocation8 + $0x34] sm:$0xf]
        %v741 = vld [vmem:[#allocation8 + $0x38] sm:$0xf]
        %v742 = vld [vmem:[#allocation8 + $0x3c] sm:$0xf]
        %v743 = vld [vmem:[%s612] sm:$0xff]
        %v744 = vpack.c.bf16 %v743, %v743
        %v745 = vld [vmem:[#allocation10] sm:$0xf]
        %v747 = vsel %vm621, %v744, 0
        %v750 = vsel %vm625, %v745, 0
        %752 = vmatpush.bf16.msra.mxu0 0
        %753 = vmatpush.bf16.msra.mxu0 0
        %754 = vmatpush.bf16.msra.mxu0 0
        %755 = vmatpush.bf16.msra.mxu0 0
        %756 = vmatpush.bf16.msra.mxu0 0
        %757 = vmatpush.bf16.msra.mxu0 0
        %758 = vmatpush.bf16.msra.mxu0 0
        %759 = vmatpush.bf16.msra.mxu0 %v750
        %760 = vmatmul.bf16.gmra.mxu0 %v747
        %v761 = vpop.f32.mrf.mxu0
        %v762 = vadd.f32 0.0, %v761
        %v763 = vpop.f32.mrf.mxu0
        %764 = vdwg.mxu0
        %v781 = vunpack.c.l.b16 %v727
        %v782 = vunpack.c.l.b16 %v728
        %v783 = vunpack.c.l.b16 %v729
        %v784 = vunpack.c.l.b16 %v730
        %v785 = vunpack.c.l.b16 %v731
        %v786 = vunpack.c.l.b16 %v732
        %v787 = vunpack.c.l.b16 %v733
        %v788 = vunpack.c.l.b16 %v734
        %v789 = vunpack.c.l.b16 %v735
        %v790 = vunpack.c.l.b16 %v736
        %v791 = vunpack.c.l.b16 %v737
        %v792 = vunpack.c.l.b16 %v738
        %v793 = vunpack.c.l.b16 %v739
        %v794 = vunpack.c.l.b16 %v740
        %v795 = vunpack.c.l.b16 %v741
        %v796 = vunpack.c.l.b16 %v742
        %v797 = vpack.c.b16 %v782, %v781
        %v798 = vpack.c.b16 %v784, %v783
        %v799 = vpack.c.b16 %v786, %v785
        %v800 = vpack.c.b16 %v788, %v787
        %v801 = vpack.c.b16 %v790, %v789
        %v802 = vpack.c.b16 %v792, %v791
        %v803 = vpack.c.b16 %v794, %v793
        %v804 = vpack.c.b16 %v796, %v795
        %813 = vmatpush.bf16.msra.mxu0 %v804
        %814 = vmatpush.bf16.msra.mxu0 %v803
        %815 = vmatpush.bf16.msra.mxu0 %v802
        %816 = vmatpush.bf16.msra.mxu0 %v801
        %817 = vmatpush.bf16.msra.mxu0 %v800
        %818 = vmatpush.bf16.msra.mxu0 %v799
        %819 = vmatpush.bf16.msra.mxu0 %v798
        %820 = vmatpush.bf16.msra.mxu0 %v797
        %821 = vmatmul.bf16.gmra.mxu0 %v726
        %v822 = vpop.f32.mrf.mxu0
        %v823 = vadd.f32 %v762, %v822
        %v824 = vpop.f32.mrf.mxu0
        %825 = vdwg.mxu0
        %v826 = vld [vmem:[#allocation11] sm:$0x1]
        %v828 = vperm.slane %v826, 0
        %v830 = vadd.f32 %v823, %v828
        %v831 = vmax.f32 %v830, 0.0
        %v832 = vpack.c.bf16 %v831, %v831
        %v833 = vld [vmem:[%s9] sm:$0xf]
        %v834 = vld [vmem:[%s9 + $0x4] sm:$0xf]
        %v835 = vld [vmem:[%s9 + $0x8] sm:$0xf]
        %v836 = vld [vmem:[%s9 + $0xc] sm:$0xf]
        %v837 = vld [vmem:[%s9 + $0x10] sm:$0xf]
        %v838 = vld [vmem:[%s9 + $0x14] sm:$0xf]
        %v839 = vld [vmem:[%s9 + $0x18] sm:$0xf]
        %v840 = vld [vmem:[%s9 + $0x1c] sm:$0xf]
        %v841 = vld [vmem:[%s9 + $0x20] sm:$0xf]
        %v842 = vld [vmem:[%s9 + $0x24] sm:$0xf]
        %v843 = vld [vmem:[%s9 + $0x28] sm:$0xf]
        %v844 = vld [vmem:[%s9 + $0x2c] sm:$0xf]
        %v845 = vld [vmem:[%s9 + $0x30] sm:$0xf]
        %v846 = vld [vmem:[%s9 + $0x34] sm:$0xf]
        %v847 = vld [vmem:[%s9 + $0x38] sm:$0xf]
        %v848 = vld [vmem:[%s9 + $0x3c] sm:$0xf]
        %v849 = vld [vmem:[%s10] sm:$0x1]
        %v851 = vperm.slane %v849, 0
        %v869 = vunpack.c.l.b16 %v833
        %v870 = vunpack.c.l.b16 %v834
        %v871 = vunpack.c.l.b16 %v835
        %v872 = vunpack.c.l.b16 %v836
        %v873 = vunpack.c.l.b16 %v837
        %v874 = vunpack.c.l.b16 %v838
        %v875 = vunpack.c.l.b16 %v839
        %v876 = vunpack.c.l.b16 %v840
        %v877 = vunpack.c.l.b16 %v841
        %v878 = vunpack.c.l.b16 %v842
        %v879 = vunpack.c.l.b16 %v843
        %v880 = vunpack.c.l.b16 %v844
        %v881 = vunpack.c.l.b16 %v845
        %v882 = vunpack.c.l.b16 %v846
        %v883 = vunpack.c.l.b16 %v847
        %v884 = vunpack.c.l.b16 %v848
        %v885 = vpack.c.b16 %v870, %v869
        %v886 = vpack.c.b16 %v872, %v871
        %v887 = vpack.c.b16 %v874, %v873
        %v888 = vpack.c.b16 %v876, %v875
        %v889 = vpack.c.b16 %v878, %v877
        %v890 = vpack.c.b16 %v880, %v879
        %v891 = vpack.c.b16 %v882, %v881
        %v892 = vpack.c.b16 %v884, %v883
        %901 = vmatpush.bf16.msra.mxu0 %v892
        %902 = vmatpush.bf16.msra.mxu0 %v891
        %903 = vmatpush.bf16.msra.mxu0 %v890
        %904 = vmatpush.bf16.msra.mxu0 %v889
        %905 = vmatpush.bf16.msra.mxu0 %v888
        %906 = vmatpush.bf16.msra.mxu0 %v887
        %907 = vmatpush.bf16.msra.mxu0 %v886
        %908 = vmatpush.bf16.msra.mxu0 %v885
        %909 = vmatmul.bf16.gmra.mxu0 %v832
        %v910 = vpop.f32.mrf.mxu0
        %v911 = vadd.f32 %v851, %v910
        %v912 = vpop.f32.mrf.mxu0
        %913 = vdwg.mxu0
        %v914 = vmax.f32 %v911, 0.0
        %v915 = vpack.c.bf16 %v914, %v914
        %v916 = vld [vmem:[#allocation13] sm:$0xf]
        %v917 = vld [vmem:[#allocation13 + $0x4] sm:$0xf]
        %v918 = vld [vmem:[#allocation13 + $0x8] sm:$0xf]
        %v919 = vld [vmem:[#allocation13 + $0xc] sm:$0xf]
        %v920 = vld [vmem:[#allocation13 + $0x10] sm:$0xf]
        %v921 = vld [vmem:[#allocation13 + $0x14] sm:$0xf]
        %v922 = vld [vmem:[#allocation13 + $0x18] sm:$0xf]
        %v923 = vld [vmem:[#allocation13 + $0x1c] sm:$0xf]
        %v924 = vld [vmem:[#allocation13 + $0x20] sm:$0xf]
        %v925 = vld [vmem:[#allocation13 + $0x24] sm:$0xf]
        %v926 = vld [vmem:[#allocation13 + $0x28] sm:$0xf]
        %v927 = vld [vmem:[#allocation13 + $0x2c] sm:$0xf]
        %v928 = vld [vmem:[#allocation13 + $0x30] sm:$0xf]
        %v929 = vld [vmem:[#allocation13 + $0x34] sm:$0xf]
        %v930 = vld [vmem:[#allocation13 + $0x38] sm:$0xf]
        %v931 = vld [vmem:[#allocation13 + $0x3c] sm:$0xf]
        %v932 = vld [vmem:[%s12] sm:$0x1]
        %v934 = vperm.slane %v932, 0
        %v952 = vunpack.c.l.b16 %v916
        %v953 = vunpack.c.l.b16 %v917
        %v954 = vunpack.c.l.b16 %v918
        %v955 = vunpack.c.l.b16 %v919
        %v956 = vunpack.c.l.b16 %v920
        %v957 = vunpack.c.l.b16 %v921
        %v958 = vunpack.c.l.b16 %v922
        %v959 = vunpack.c.l.b16 %v923
        %v960 = vunpack.c.l.b16 %v924
        %v961 = vunpack.c.l.b16 %v925
        %v962 = vunpack.c.l.b16 %v926
        %v963 = vunpack.c.l.b16 %v927
        %v964 = vunpack.c.l.b16 %v928
        %v965 = vunpack.c.l.b16 %v929
        %v966 = vunpack.c.l.b16 %v930
        %v967 = vunpack.c.l.b16 %v931
        %v968 = vpack.c.b16 %v953, %v952
        %v969 = vpack.c.b16 %v955, %v954
        %v970 = vpack.c.b16 %v957, %v956
        %v971 = vpack.c.b16 %v959, %v958
        %v972 = vpack.c.b16 %v961, %v960
        %v973 = vpack.c.b16 %v963, %v962
        %v974 = vpack.c.b16 %v965, %v964
        %v975 = vpack.c.b16 %v967, %v966
        %984 = vmatpush.bf16.msra.mxu0 %v975
        %985 = vmatpush.bf16.msra.mxu0 %v974
        %986 = vmatpush.bf16.msra.mxu0 %v973
        %987 = vmatpush.bf16.msra.mxu0 %v972
        %988 = vmatpush.bf16.msra.mxu0 %v971
        %989 = vmatpush.bf16.msra.mxu0 %v970
        %990 = vmatpush.bf16.msra.mxu0 %v969
        %991 = vmatpush.bf16.msra.mxu0 %v968
        %992 = vmatmul.bf16.gmra.mxu0 %v915
        %v993 = vpop.f32.mrf.mxu0
        %v994 = vadd.f32 %v934, %v993
        %v995 = vpop.f32.mrf.mxu0
        %996 = vdwg.mxu0
        %v997 = vmax.f32 %v994, 0.0
        %v998 = vpack.c.bf16 %v997, %v997
        %v999 = vld [vmem:[%s13] sm:$0xf]
        %v1000 = vld [vmem:[%s13 + $0x4] sm:$0xf]
        %v1001 = vld [vmem:[%s13 + $0x8] sm:$0xf]
        %v1002 = vld [vmem:[%s13 + $0xc] sm:$0xf]
        %v1003 = vld [vmem:[%s13 + $0x10] sm:$0xf]
        %v1004 = vld [vmem:[%s13 + $0x14] sm:$0xf]
        %v1005 = vld [vmem:[%s13 + $0x18] sm:$0xf]
        %v1006 = vld [vmem:[%s13 + $0x1c] sm:$0xf]
        %v1007 = vld [vmem:[%s13 + $0x20] sm:$0xf]
        %v1008 = vld [vmem:[%s13 + $0x24] sm:$0xf]
        %v1009 = vld [vmem:[%s13 + $0x28] sm:$0xf]
        %v1010 = vld [vmem:[%s13 + $0x2c] sm:$0xf]
        %v1011 = vld [vmem:[%s13 + $0x30] sm:$0xf]
        %v1012 = vld [vmem:[%s13 + $0x34] sm:$0xf]
        %v1013 = vld [vmem:[%s13 + $0x38] sm:$0xf]
        %v1014 = vld [vmem:[%s13 + $0x3c] sm:$0xf]
        %v1015 = vld [vmem:[%s14] sm:$0x1]
        %v1017 = vperm.slane %v1015, 0
        %v1035 = vunpack.c.l.b16 %v999
        %v1036 = vunpack.c.l.b16 %v1000
        %v1037 = vunpack.c.l.b16 %v1001
        %v1038 = vunpack.c.l.b16 %v1002
        %v1039 = vunpack.c.l.b16 %v1003
        %v1040 = vunpack.c.l.b16 %v1004
        %v1041 = vunpack.c.l.b16 %v1005
        %v1042 = vunpack.c.l.b16 %v1006
        %v1043 = vunpack.c.l.b16 %v1007
        %v1044 = vunpack.c.l.b16 %v1008
        %v1045 = vunpack.c.l.b16 %v1009
        %v1046 = vunpack.c.l.b16 %v1010
        %v1047 = vunpack.c.l.b16 %v1011
        %v1048 = vunpack.c.l.b16 %v1012
        %v1049 = vunpack.c.l.b16 %v1013
        %v1050 = vunpack.c.l.b16 %v1014
        %v1051 = vpack.c.b16 %v1036, %v1035
        %v1052 = vpack.c.b16 %v1038, %v1037
        %v1053 = vpack.c.b16 %v1040, %v1039
        %v1054 = vpack.c.b16 %v1042, %v1041
        %v1055 = vpack.c.b16 %v1044, %v1043
        %v1056 = vpack.c.b16 %v1046, %v1045
        %v1057 = vpack.c.b16 %v1048, %v1047
        %v1058 = vpack.c.b16 %v1050, %v1049
        %1067 = vmatpush.bf16.msra.mxu0 %v1058
        %1068 = vmatpush.bf16.msra.mxu0 %v1057
        %1069 = vmatpush.bf16.msra.mxu0 %v1056
        %1070 = vmatpush.bf16.msra.mxu0 %v1055
        %1071 = vmatpush.bf16.msra.mxu0 %v1054
        %1072 = vmatpush.bf16.msra.mxu0 %v1053
        %1073 = vmatpush.bf16.msra.mxu0 %v1052
        %1074 = vmatpush.bf16.msra.mxu0 %v1051
        %1075 = vmatmul.bf16.gmra.mxu0 %v998
        %v1076 = vpop.f32.mrf.mxu0
        %v1077 = vadd.f32 %v1017, %v1076
        %v1078 = vpop.f32.mrf.mxu0
        %1079 = vdwg.mxu0
        %v1080 = vmax.f32 %v1077, 0.0
        %vm1081 = vcmask 130048
        %1082 = vst.msk [vmem:[%s604] sm:$0xff] %vm1081, %v1080
        %s1083 = sand.u32 %s366, 1
        %s1084 = scalar_lea.sflag [#allocation4], %s1083
        %s1085 = sand.u32 %s366, 1
        %s1086 = smul.addr %s1085, 8
        %s1087 = scalar_lea.vmem [#allocation14], %s1086
        // Predicated region
        $region109: #{tpu_custom_call.1} parent=79 // pred_check
          %p1088 = pneg %p376
        $region110: #{tpu_custom_call.1} parent=79 // pred_check_branch
          %1090 = sbr.rel (%p1088) target = $region112
        $region111: #{tpu_custom_call.1} parent=79 // pred_region
          %1092 = vsyncadd %s1084, 0
          %s1093 = smul.addr %s33, 8
          %s1094 = scalar_lea.hbm %s15, %s1093
          %s1096 = sshll.u32 %s1087, 4
          %s1097 = int_to_ptr.vmem [resolvable:$true] %s1096
          %s1098 = sshll.u32 %s1094, 4
          %s1099 = int_to_ptr.hbm [resolvable:$true] %s1098
          %1101 = dma.vmem_to_hbm [thread:$0]  %s1097, 128, %s1099, %s1084
        $region112: #{tpu_custom_call.1} parent=79 // pred_fallthru
          _
      $region80: #{tpu_custom_call.1} parent=5 // pred_fallthru
        _
      %p1102 = scmp.le.s32.totalorder 2, %s28
      // Predicated region
      $region113: #{tpu_custom_call.1} parent=5 // pred_check
        %p1103 = pneg %p1102
      $region114: #{tpu_custom_call.1} parent=5 // pred_check_branch
        %1105 = sbr.rel (%p1103) target = $region116
      $region115: #{tpu_custom_call.1} parent=5 // pred_region
        %s1106 = ssub.s32 %s28, 2
        // Predicated region
        $region117: #{tpu_custom_call.1} parent=115 // pred_check
          %p1107 = pneg %p382
        $region118: #{tpu_custom_call.1} parent=115 // pred_check_branch
          %1109 = sbr.rel (%p1107) target = $region120
        $region119: #{tpu_custom_call.1} parent=115 // pred_region
          %s1110 = sand.u32 %s367, 1
          %s1111 = scalar_lea.sflag [#allocation4], %s1110
          %s1112 = sand.u32 %s367, 1
          %s1113 = smul.addr %s1112, 8
          %s1114 = scalar_lea.vmem [#allocation14], %s1113
          %1116 = dma.done %s1111, 128
        $region120: #{tpu_custom_call.1} parent=115 // pred_fallthru
          _
      $region116: #{tpu_custom_call.1} parent=5 // pred_fallthru
        _
    $region6: #{tpu_custom_call.1} parent=1 // loop_footer
      %s32 = sadd.s32 1, %s28
    $region7: #{tpu_custom_call.1} parent=1 // loop_footer_branch
      %27 = sbr.rel target = $region3
    $region8: #{tpu_custom_call.1} parent=1 // loop_exit
      _
    %1117 = vsyncpa [#allocation3], 1
    %s1118 = scalar_lea.sflag [#allocation3], 1
    %1119 = vsyncpa %s1118, 1
    %1120 = vsyncpa [#allocation6], 1
    %1121 = vsyncpa [#allocation9], 1
    %1122 = vsyncpa [#allocation12], 1
    %1123 = vsyncpa [#allocation4], 1
    %s1124 = scalar_lea.sflag [#allocation4], 1
    %1125 = vsyncpa %s1124, 1

// kernel: tpu_custom_call.1
$region0: #{tpu_custom_call.1}
  #allocation0 [shape = 'u32[]', space=smem, size = 0x4, offset = 0x4, fixed_abs, tag = 'smem constant byte address 0x4 - core index']
  #allocation1 [shape = 'u32[72,128]{1,0:T(1,128)}', space=vmem, size = 0x9000, scoped, tag = 'internal scratch']
  %s0 = inlined_call_operand.vmem [shape: f32[16,8], index: 0, kind: input, shape index: {}]
  %s1 = inlined_call_operand.vmem [shape: f32[16,8], index: 1, kind: input, shape index: {}]
  %s2 = inlined_call_operand.hbm [shape: bf16[8,128], index: 2, kind: input, shape index: {}]
  %s3 = inlined_call_operand.hbm [shape: f32[1,128], index: 3, kind: input, shape index: {}]
  %s4 = inlined_call_operand.vmem [shape: bf16[128,128], index: 4, kind: input, shape index: {}]
  %s5 = inlined_call_operand.hbm [shape: f32[1,128], index: 5, kind: input, shape index: {}]
  %s6 = inlined_call_operand.hbm [shape: bf16[128,128], index: 6, kind: input, shape index: {}]
  %s7 = inlined_call_operand.hbm [shape: bf16[8,128], index: 7, kind: input, shape index: {}]
  %s8 = inlined_call_operand.hbm [shape: f32[1,128], index: 8, kind: input, shape index: {}]
  %s9 = inlined_call_operand.vmem [shape: bf16[128,128], index: 9, kind: input, shape index: {}]
  %s10 = inlined_call_operand.vmem [shape: f32[1,128], index: 10, kind: input, shape index: {}]
  %s11 = inlined_call_operand.hbm [shape: bf16[128,128], index: 11, kind: input, shape index: {}]
  %s12 = inlined_call_operand.vmem [shape: f32[1,128], index: 12, kind: input, shape index: {}]
  %s13 = inlined_call_operand.vmem [shape: bf16[128,16], index: 13, kind: input, shape index: {}]
  %s14 = inlined_call_operand.vmem [shape: f32[1,16], index: 14, kind: input, shape index: {}]
  %s15 = inlined_call_operand.hbm [shape: f32[16,16], index: 15, kind: output, shape index: {}]
  %s16 = sld [smem:[#allocation0]]
  $region121: #{tpu_custom_call.1} parent=0
    _
  %s18 = ssub.s32 1, %s16
  %s19 = scalar_select 0, %s18, %s16
  $region1: #{tpu_custom_call.1} parent=0
    #allocation2 [shape = 'u8[2048]{0}', space=vmem, size = 0x800, scoped, tag = 'input window, operand 2, single buffered']
    #allocation3 [shape = 's32[2]{0}', space=sflag, size = 0x8, scoped, tag = 'scoped memory for tpu_custom_call.1']
    #allocation4 [shape = 's32[2]{0}', space=sflag, size = 0x8, scoped, tag = 'scoped memory for tpu_custom_call.1']
    #allocation5 [shape = 'u8[512]{0}', space=vmem, size = 0x400, scoped, tag = 'input window, operand 3, single buffered']
    #allocation6 [shape = 's32[1]{0}', space=sflag, size = 0x4, scoped, tag = 'scoped memory for tpu_custom_call.1']
    #allocation7 [shape = 'u8[512]{0}', space=vmem, size = 0x400, scoped, tag = 'input window, operand 5, single buffered']
    #allocation8 [shape = 'u8[32768]{0}', space=vmem, size = 0x8000, scoped, tag = 'input window, operand 6, single buffered']
    #allocation9 [shape = 's32[1]{0}', space=sflag, size = 0x4, scoped, tag = 'scoped memory for tpu_custom_call.1']
    #allocation10 [shape = 'u8[2048]{0}', space=vmem, size = 0x800, scoped, tag = 'input window, operand 7, single buffered']
    #allocation11 [shape = 'u8[512]{0}', space=vmem, size = 0x400, scoped, tag = 'input window, operand 8, single buffered']
    #allocation12 [shape = 's32[1]{0}', space=sflag, size = 0x4, scoped, tag = 'scoped memory for tpu_custom_call.1']
    #allocation13 [shape = 'u8[32768]{0}', space=vmem, size = 0x8000, scoped, tag = 'input window, operand 11, single buffered']
    #allocation14 [shape = 'u8[8192]{0}', space=vmem, size = 0x2000, scoped, tag = 'output window, operand 0']
    %20 = vsyncpa [#allocation3], 0
    %21 = vsyncpa [#allocation6], 0
    %22 = vsyncpa [#allocation9], 0
    %23 = vsyncpa [#allocation12], 0
    %24 = vsyncpa [#allocation4], 0
    %s25 = scalar_lea.sflag [#allocation4], 1
    %26 = vsyncpa %s25, 0
    loop: start=0, step=1, limit=4
    $region2: #{tpu_custom_call.1} parent=1 // loop_pre_header
      _
    $region3: #{tpu_custom_call.1} parent=1 // loop_header
      %s28 = sphi 0, %s32
      %p29 = scmp.ge.s32.totalorder %s28, 4
      %s38 = sphi 0, %s40
      %s41 = sphi 0, %s38
      %s42 = sphi 0, %s41
      %s58 = sphi 0, %s42
      %s64 = sphi 0, %s66
      %s67 = sphi 0, %s64
      %s68 = sphi 0, %s67
      %s84 = sphi 0, %s68
      %s88 = sphi 0, %s88
      %s90 = sphi 0, %s88
      %s91 = sphi 0, %s90
      %s105 = sphi 0, %s91
      %s109 = sphi 0, %s109
      %s111 = sphi 0, %s109
      %s112 = sphi 0, %s111
      %s126 = sphi 0, %s112
      %s130 = sphi 0, %s130
      %s132 = sphi 0, %s130
      %s133 = sphi 0, %s132
      %s147 = sphi 0, %s133
      %s151 = sphi 0, %s151
      %s153 = sphi 0, %s151
      %s154 = sphi 0, %s153
      %s168 = sphi 0, %s154
      %s172 = sphi 0, %s172
      %s174 = sphi 0, %s172
      %s175 = sphi 0, %s174
      %s189 = sphi 0, %s175
      %s193 = sphi 0, %s193
      %s195 = sphi 0, %s193
      %s196 = sphi 0, %s195
      %s210 = sphi 0, %s196
      %s214 = sphi 0, %s214
      %s216 = sphi 0, %s214
      %s217 = sphi 0, %s216
      %s231 = sphi 0, %s217
      %s235 = sphi 0, %s235
      %s237 = sphi 0, %s235
      %s238 = sphi 0, %s237
      %s252 = sphi 0, %s238
      %s256 = sphi 0, %s256
      %s258 = sphi 0, %s256
      %s259 = sphi 0, %s258
      %s273 = sphi 0, %s259
      %s277 = sphi 0, %s277
      %s279 = sphi 0, %s277
      %s280 = sphi 0, %s279
      %s294 = sphi 0, %s280
      %s298 = sphi 0, %s298
      %s300 = sphi 0, %s298
      %s301 = sphi 0, %s300
      %s315 = sphi 0, %s301
      %s319 = sphi 0, %s319
      %s321 = sphi 0, %s319
      %s322 = sphi 0, %s321
      %s336 = sphi 0, %s322
      %s340 = sphi 0, %s340
      %s342 = sphi 0, %s340
      %s343 = sphi 0, %s342
      %s357 = sphi 0, %s343
      %s363 = sphi 0, %s365
      %s366 = sphi 0, %s363
      %s367 = sphi 0, %s366
      %s383 = sphi 0, %s367
    $region4: #{tpu_custom_call.1} parent=1 // loop_header_branch
      %31 = sbr.rel (%p29) target = $region8
    $region5: #{tpu_custom_call.1} parent=1 // loop_body
      %s33 = ssub.s32 %s28, 1
      %s34 = ssub.s32 %s28, 2
      %s35 = sadd.s32 %s28, 1
      %s36 = ssub.s32 %s28, %s35
      %p37 = scmp.eq.s32.totalorder %s36, 0
      %s39 = sadd.s32 %s38, 1
      %s40 = scalar_select %p37, %s38, %s39
      %p43 = pneg %p37
      %p44 = scmp.eq.s32.totalorder %s28, 1
      %p45 = por %p43, %p44
      %p46 = scmp.ne.s32.totalorder %s38, %s41
      %p47 = scmp.eq.s32.totalorder %s28, 0
      %p48 = por %p46, %p47
      %p49 = scmp.ne.s32.totalorder %s38, %s41
      %p50 = scmp.eq.s32.totalorder %s33, 1
      %p51 = por %p49, %p50
      %p52 = scmp.ne.s32.totalorder %s41, %s42
      %p53 = scmp.eq.s32.totalorder %s33, 0
      %p54 = por %p52, %p53
      %p55 = scmp.ne.s32.totalorder %s41, %s42
      %p56 = scmp.eq.s32.totalorder %s34, 1
      %p57 = por %p55, %p56
      %p59 = scmp.ne.s32.totalorder %s42, %s58
      %p60 = scmp.eq.s32.totalorder %s34, 0
      %p61 = por %p59, %p60
      %s62 = ssub.s32 %s28, %s35
      %p63 = scmp.eq.s32.totalorder %s62, 0
      %s65 = sadd.s32 %s64, 1
      %s66 = scalar_select %p63, %s64, %s65
      %p69 = pneg %p63
      %p70 = scmp.eq.s32.totalorder %s28, 1
      %p71 = por %p69, %p70
      %p72 = scmp.ne.s32.totalorder %s64, %s67
      %p73 = scmp.eq.s32.totalorder %s28, 0
      %p74 = por %p72, %p73
      %p75 = scmp.ne.s32.totalorder %s64, %s67
      %p76 = scmp.eq.s32.totalorder %s33, 1
      %p77 = por %p75, %p76
      %p78 = scmp.ne.s32.totalorder %s67, %s68
      %p79 = scmp.eq.s32.totalorder %s33, 0
      %p80 = por %p78, %p79
      %p81 = scmp.ne.s32.totalorder %s67, %s68
      %p82 = scmp.eq.s32.totalorder %s34, 1
      %p83 = por %p81, %p82
      %p85 = scmp.ne.s32.totalorder %s68, %s84
      %p86 = scmp.eq.s32.totalorder %s34, 0
      %p87 = por %p85, %p86
      %s89 = sadd.s32 %s88, 1
      %p92 = scmp.eq.s32.totalorder %s28, 1
      %p93 = scmp.ne.s32.totalorder %s88, %s90
      %p94 = scmp.eq.s32.totalorder %s28, 0
      %p95 = por %p93, %p94
      %p96 = scmp.ne.s32.totalorder %s88, %s90
      %p97 = scmp.eq.s32.totalorder %s33, 1
      %p98 = por %p96, %p97
      %p99 = scmp.ne.s32.totalorder %s90, %s91
      %p100 = scmp.eq.s32.totalorder %s33, 0
      %p101 = por %p99, %p100
      %p102 = scmp.ne.s32.totalorder %s90, %s91
      %p103 = scmp.eq.s32.totalorder %s34, 1
      %p104 = por %p102, %p103
      %p106 = scmp.ne.s32.totalorder %s91, %s105
      %p107 = scmp.eq.s32.totalorder %s34, 0
      %p108 = por %p106, %p107
      %s110 = sadd.s32 %s109, 1
      %p113 = scmp.eq.s32.totalorder %s28, 1
      %p114 = scmp.ne.s32.totalorder %s109, %s111
      %p115 = scmp.eq.s32.totalorder %s28, 0
      %p116 = por %p114, %p115
      %p117 = scmp.ne.s32.totalorder %s109, %s111
      %p118 = scmp.eq.s32.totalorder %s33, 1
      %p119 = por %p117, %p118
      %p120 = scmp.ne.s32.totalorder %s111, %s112
      %p121 = scmp.eq.s32.totalorder %s33, 0
      %p122 = por %p120, %p121
      %p123 = scmp.ne.s32.totalorder %s111, %s112
      %p124 = scmp.eq.s32.totalorder %s34, 1
      %p125 = por %p123, %p124
      %p127 = scmp.ne.s32.totalorder %s112, %s126
      %p128 = scmp.eq.s32.totalorder %s34, 0
      %p129 = por %p127, %p128
      %s131 = sadd.s32 %s130, 1
      %p134 = scmp.eq.s32.totalorder %s28, 1
      %p135 = scmp.ne.s32.totalorder %s130, %s132
      %p136 = scmp.eq.s32.totalorder %s28, 0
      %p137 = por %p135, %p136
      %p138 = scmp.ne.s32.totalorder %s130, %s132
      %p139 = scmp.eq.s32.totalorder %s33, 1
      %p140 = por %p138, %p139
      %p141 = scmp.ne.s32.totalorder %s132, %s133
      %p142 = scmp.eq.s32.totalorder %s33, 0
      %p143 = por %p141, %p142
      %p144 = scmp.ne.s32.totalorder %s132, %s133
      %p145 = scmp.eq.s32.totalorder %s34, 1
      %p146 = por %p144, %p145
      %p148 = scmp.ne.s32.totalorder %s133, %s147
      %p149 = scmp.eq.s32.totalorder %s34, 0
      %p150 = por %p148, %p149
      %s152 = sadd.s32 %s151, 1
      %p155 = scmp.eq.s32.totalorder %s28, 1
      %p156 = scmp.ne.s32.totalorder %s151, %s153
      %p157 = scmp.eq.s32.totalorder %s28, 0
      %p158 = por %p156, %p157
      %p159 = scmp.ne.s32.totalorder %s151, %s153
      %p160 = scmp.eq.s32.totalorder %s33, 1
      %p161 = por %p159, %p160
      %p162 = scmp.ne.s32.totalorder %s153, %s154
      %p163 = scmp.eq.s32.totalorder %s33, 0
      %p164 = por %p162, %p163
      %p165 = scmp.ne.s32.totalorder %s153, %s154
      %p166 = scmp.eq.s32.totalorder %s34, 1
      %p167 = por %p165, %p166
      %p169 = scmp.ne.s32.totalorder %s154, %s168
      %p170 = scmp.eq.s32.totalorder %s34, 0
      %p171 = por %p169, %p170
      %s173 = sadd.s32 %s172, 1
      %p176 = scmp.eq.s32.totalorder %s28, 1
      %p177 = scmp.ne.s32.totalorder %s172, %s174
      %p178 = scmp.eq.s32.totalorder %s28, 0
      %p179 = por %p177, %p178
      %p180 = scmp.ne.s32.totalorder %s172, %s174
      %p181 = scmp.eq.s32.totalorder %s33, 1
      %p182 = por %p180, %p181
      %p183 = scmp.ne.s32.totalorder %s174, %s175
      %p184 = scmp.eq.s32.totalorder %s33, 0
      %p185 = por %p183, %p184
      %p186 = scmp.ne.s32.totalorder %s174, %s175
      %p187 = scmp.eq.s32.totalorder %s34, 1
      %p188 = por %p186, %p187
      %p190 = scmp.ne.s32.totalorder %s175, %s189
      %p191 = scmp.eq.s32.totalorder %s34, 0
      %p192 = por %p190, %p191
      %s194 = sadd.s32 %s193, 1
      %p197 = scmp.eq.s32.totalorder %s28, 1
      %p198 = scmp.ne.s32.totalorder %s193, %s195
      %p199 = scmp.eq.s32.totalorder %s28, 0
      %p200 = por %p198, %p199
      %p201 = scmp.ne.s32.totalorder %s193, %s195
      %p202 = scmp.eq.s32.totalorder %s33, 1
      %p203 = por %p201, %p202
      %p204 = scmp.ne.s32.totalorder %s195, %s196
      %p205 = scmp.eq.s32.totalorder %s33, 0
      %p206 = por %p204, %p205
      %p207 = scmp.ne.s32.totalorder %s195, %s196
      %p208 = scmp.eq.s32.totalorder %s34, 1
      %p209 = por %p207, %p208
      %p211 = scmp.ne.s32.totalorder %s196, %s210
      %p212 = scmp.eq.s32.totalorder %s34, 0
      %p213 = por %p211, %p212
      %s215 = sadd.s32 %s214, 1
      %p218 = scmp.eq.s32.totalorder %s28, 1
      %p219 = scmp.ne.s32.totalorder %s214, %s216
      %p220 = scmp.eq.s32.totalorder %s28, 0
      %p221 = por %p219, %p220
      %p222 = scmp.ne.s32.totalorder %s214, %s216
      %p223 = scmp.eq.s32.totalorder %s33, 1
      %p224 = por %p222, %p223
      %p225 = scmp.ne.s32.totalorder %s216, %s217
      %p226 = scmp.eq.s32.totalorder %s33, 0
      %p227 = por %p225, %p226
      %p228 = scmp.ne.s32.totalorder %s216, %s217
      %p229 = scmp.eq.s32.totalorder %s34, 1
      %p230 = por %p228, %p229
      %p232 = scmp.ne.s32.totalorder %s217, %s231
      %p233 = scmp.eq.s32.totalorder %s34, 0
      %p234 = por %p232, %p233
      %s236 = sadd.s32 %s235, 1
      %p239 = scmp.eq.s32.totalorder %s28, 1
      %p240 = scmp.ne.s32.totalorder %s235, %s237
      %p241 = scmp.eq.s32.totalorder %s28, 0
      %p242 = por %p240, %p241
      %p243 = scmp.ne.s32.totalorder %s235, %s237
      %p244 = scmp.eq.s32.totalorder %s33, 1
      %p245 = por %p243, %p244
      %p246 = scmp.ne.s32.totalorder %s237, %s238
      %p247 = scmp.eq.s32.totalorder %s33, 0
      %p248 = por %p246, %p247
      %p249 = scmp.ne.s32.totalorder %s237, %s238
      %p250 = scmp.eq.s32.totalorder %s34, 1
      %p251 = por %p249, %p250
      %p253 = scmp.ne.s32.totalorder %s238, %s252
      %p254 = scmp.eq.s32.totalorder %s34, 0
      %p255 = por %p253, %p254
      %s257 = sadd.s32 %s256, 1
      %p260 = scmp.eq.s32.totalorder %s28, 1
      %p261 = scmp.ne.s32.totalorder %s256, %s258
      %p262 = scmp.eq.s32.totalorder %s28, 0
      %p263 = por %p261, %p262
      %p264 = scmp.ne.s32.totalorder %s256, %s258
      %p265 = scmp.eq.s32.totalorder %s33, 1
      %p266 = por %p264, %p265
      %p267 = scmp.ne.s32.totalorder %s258, %s259
      %p268 = scmp.eq.s32.totalorder %s33, 0
      %p269 = por %p267, %p268
      %p270 = scmp.ne.s32.totalorder %s258, %s259
      %p271 = scmp.eq.s32.totalorder %s34, 1
      %p272 = por %p270, %p271
      %p274 = scmp.ne.s32.totalorder %s259, %s273
      %p275 = scmp.eq.s32.totalorder %s34, 0
      %p276 = por %p274, %p275
      %s278 = sadd.s32 %s277, 1
      %p281 = scmp.eq.s32.totalorder %s28, 1
      %p282 = scmp.ne.s32.totalorder %s277, %s279
      %p283 = scmp.eq.s32.totalorder %s28, 0
      %p284 = por %p282, %p283
      %p285 = scmp.ne.s32.totalorder %s277, %s279
      %p286 = scmp.eq.s32.totalorder %s33, 1
      %p287 = por %p285, %p286
      %p288 = scmp.ne.s32.totalorder %s279, %s280
      %p289 = scmp.eq.s32.totalorder %s33, 0
      %p290 = por %p288, %p289
      %p291 = scmp.ne.s32.totalorder %s279, %s280
      %p292 = scmp.eq.s32.totalorder %s34, 1
      %p293 = por %p291, %p292
      %p295 = scmp.ne.s32.totalorder %s280, %s294
      %p296 = scmp.eq.s32.totalorder %s34, 0
      %p297 = por %p295, %p296
      %s299 = sadd.s32 %s298, 1
      %p302 = scmp.eq.s32.totalorder %s28, 1
      %p303 = scmp.ne.s32.totalorder %s298, %s300
      %p304 = scmp.eq.s32.totalorder %s28, 0
      %p305 = por %p303, %p304
      %p306 = scmp.ne.s32.totalorder %s298, %s300
      %p307 = scmp.eq.s32.totalorder %s33, 1
      %p308 = por %p306, %p307
      %p309 = scmp.ne.s32.totalorder %s300, %s301
      %p310 = scmp.eq.s32.totalorder %s33, 0
      %p311 = por %p309, %p310
      %p312 = scmp.ne.s32.totalorder %s300, %s301
      %p313 = scmp.eq.s32.totalorder %s34, 1
      %p314 = por %p312, %p313
      %p316 = scmp.ne.s32.totalorder %s301, %s315
      %p317 = scmp.eq.s32.totalorder %s34, 0
      %p318 = por %p316, %p317
      %s320 = sadd.s32 %s319, 1
      %p323 = scmp.eq.s32.totalorder %s28, 1
      %p324 = scmp.ne.s32.totalorder %s319, %s321
      %p325 = scmp.eq.s32.totalorder %s28, 0
      %p326 = por %p324, %p325
      %p327 = scmp.ne.s32.totalorder %s319, %s321
      %p328 = scmp.eq.s32.totalorder %s33, 1
      %p329 = por %p327, %p328
      %p330 = scmp.ne.s32.totalorder %s321, %s322
      %p331 = scmp.eq.s32.totalorder %s33, 0
      %p332 = por %p330, %p331
      %p333 = scmp.ne.s32.totalorder %s321, %s322
      %p334 = scmp.eq.s32.totalorder %s34, 1
      %p335 = por %p333, %p334
      %p337 = scmp.ne.s32.totalorder %s322, %s336
      %p338 = scmp.eq.s32.totalorder %s34, 0
      %p339 = por %p337, %p338
      %s341 = sadd.s32 %s340, 1
      %p344 = scmp.eq.s32.totalorder %s28, 1
      %p345 = scmp.ne.s32.totalorder %s340, %s342
      %p346 = scmp.eq.s32.totalorder %s28, 0
      %p347 = por %p345, %p346
      %p348 = scmp.ne.s32.totalorder %s340, %s342
      %p349 = scmp.eq.s32.totalorder %s33, 1
      %p350 = por %p348, %p349
      %p351 = scmp.ne.s32.totalorder %s342, %s343
      %p352 = scmp.eq.s32.totalorder %s33, 0
      %p353 = por %p351, %p352
      %p354 = scmp.ne.s32.totalorder %s342, %s343
      %p355 = scmp.eq.s32.totalorder %s34, 1
      %p356 = por %p354, %p355
      %p358 = scmp.ne.s32.totalorder %s343, %s357
      %p359 = scmp.eq.s32.totalorder %s34, 0
      %p360 = por %p358, %p359
      %s361 = ssub.s32 %s28, %s35
      %p362 = scmp.eq.s32.totalorder %s361, 0
      %s364 = sadd.s32 %s363, 1
      %s365 = scalar_select %p362, %s363, %s364
      %p368 = pneg %p362
      %p369 = scmp.eq.s32.totalorder %s28, 1
      %p370 = por %p368, %p369
      %p371 = scmp.ne.s32.totalorder %s363, %s366
      %p372 = scmp.eq.s32.totalorder %s28, 0
      %p373 = por %p371, %p372
      %p374 = scmp.ne.s32.totalorder %s363, %s366
      %p375 = scmp.eq.s32.totalorder %s33, 1
      %p376 = por %p374, %p375
      %p377 = scmp.ne.s32.totalorder %s366, %s367
      %p378 = scmp.eq.s32.totalorder %s33, 0
      %p379 = por %p377, %p378
      %p380 = scmp.ne.s32.totalorder %s366, %s367
      %p381 = scmp.eq.s32.totalorder %s34, 1
      %p382 = por %p380, %p381
      %p384 = scmp.ne.s32.totalorder %s367, %s383
      %p385 = scmp.eq.s32.totalorder %s34, 0
      %p386 = por %p384, %p385
      %p387 = scmp.le.s32.totalorder 1, %s28
      %p388 = scmp.lt.s32.totalorder %s28, 3
      %p389 = pnand %p387, %p388
      %p390 = pneg %p389
      // Predicated region
      $region9: #{tpu_custom_call.1} parent=5 // pred_check
        _
      $region10: #{tpu_custom_call.1} parent=5 // pred_check_branch
        %392 = sbr.rel (%p389) target = $region12
      $region11: #{tpu_custom_call.1} parent=5 // pred_region
        %s393 = ssub.s32 %s28, 1
        // Predicated region
        $region13: #{tpu_custom_call.1} parent=11 // pred_check
          %p394 = pneg %p101
        $region14: #{tpu_custom_call.1} parent=11 // pred_check_branch
          %396 = sbr.rel (%p394) target = $region16
        $region15: #{tpu_custom_call.1} parent=11 // pred_region
          %398 = vsyncadd [#allocation3], 0
          %s400 = sshll.u32 %s2, 4
          %s401 = int_to_ptr.hbm [resolvable:$true] %s400
          %s402 = sshll.u32 [#allocation2], 4
          %s403 = int_to_ptr.vmem [resolvable:$true] %s402
          %405 = dma.hbm_to_vmem [thread:$0]  %s401, 64, %s403, [#allocation3]
        $region16: #{tpu_custom_call.1} parent=11 // pred_fallthru
          _
        // Predicated region
        $region17: #{tpu_custom_call.1} parent=11 // pred_check
          %p406 = pneg %p122
        $region18: #{tpu_custom_call.1} parent=11 // pred_check_branch
          %408 = sbr.rel (%p406) target = $region20
        $region19: #{tpu_custom_call.1} parent=11 // pred_region
          %410 = vsyncadd [#allocation6], 0
          %s412 = sshll.u32 %s3, 4
          %s413 = int_to_ptr.hbm [resolvable:$true] %s412
          %s414 = sshll.u32 [#allocation5], 4
          %s415 = int_to_ptr.vmem [resolvable:$true] %s414
          %417 = dma.hbm_to_vmem [thread:$0]  %s413, 16, %s415, [#allocation6]
        $region20: #{tpu_custom_call.1} parent=11 // pred_fallthru
          _
        // Predicated region
        $region21: #{tpu_custom_call.1} parent=11 // pred_check
          %p418 = pneg %p143
        $region22: #{tpu_custom_call.1} parent=11 // pred_check_branch
          %420 = sbr.rel (%p418) target = $region24
        $region23: #{tpu_custom_call.1} parent=11 // pred_region
          _
        $region24: #{tpu_custom_call.1} parent=11 // pred_fallthru
          _
        // Predicated region
        $region25: #{tpu_custom_call.1} parent=11 // pred_check
          %p421 = pneg %p164
        $region26: #{tpu_custom_call.1} parent=11 // pred_check_branch
          %423 = sbr.rel (%p421) target = $region28
        $region27: #{tpu_custom_call.1} parent=11 // pred_region
          %425 = vsyncadd [#allocation6], 0
          %s427 = sshll.u32 %s5, 4
          %s428 = int_to_ptr.hbm [resolvable:$true] %s427
          %s429 = sshll.u32 [#allocation7], 4
          %s430 = int_to_ptr.vmem [resolvable:$true] %s429
          %432 = dma.hbm_to_vmem [thread:$0]  %s428, 16, %s430, [#allocation6]
        $region28: #{tpu_custom_call.1} parent=11 // pred_fallthru
          _
        // Predicated region
        $region29: #{tpu_custom_call.1} parent=11 // pred_check
          %p433 = pneg %p185
        $region30: #{tpu_custom_call.1} parent=11 // pred_check_branch
          %435 = sbr.rel (%p433) target = $region32
        $region31: #{tpu_custom_call.1} parent=11 // pred_region
          %437 = vsyncadd [#allocation9], 0
          %s438 = sshll.u32 %s6, 4
          %s439 = int_to_ptr.hbm [resolvable:$true] %s438
          %s440 = sshll.u32 [#allocation8], 4
          %s441 = int_to_ptr.vmem [resolvable:$true] %s440
          %446 = dma.hbm_to_vmem [thread:$0]  %s439, 1024, %s441, [#allocation9], 64, 64, 4
        $region32: #{tpu_custom_call.1} parent=11 // pred_fallthru
          _
        // Predicated region
        $region33: #{tpu_custom_call.1} parent=11 // pred_check
          %p447 = pneg %p206
        $region34: #{tpu_custom_call.1} parent=11 // pred_check_branch
          %449 = sbr.rel (%p447) target = $region36
        $region35: #{tpu_custom_call.1} parent=11 // pred_region
          %451 = vsyncadd [#allocation9], 0
          %s453 = sshll.u32 %s7, 4
          %s454 = int_to_ptr.hbm [resolvable:$true] %s453
          %s455 = sshll.u32 [#allocation10], 4
          %s456 = int_to_ptr.vmem [resolvable:$true] %s455
          %458 = dma.hbm_to_vmem [thread:$0]  %s454, 64, %s456, [#allocation9]
        $region36: #{tpu_custom_call.1} parent=11 // pred_fallthru
          _
        // Predicated region
        $region37: #{tpu_custom_call.1} parent=11 // pred_check
          %p459 = pneg %p227
        $region38: #{tpu_custom_call.1} parent=11 // pred_check_branch
          %461 = sbr.rel (%p459) target = $region40
        $region39: #{tpu_custom_call.1} parent=11 // pred_region
          %463 = vsyncadd [#allocation12], 0
          %s465 = sshll.u32 %s8, 4
          %s466 = int_to_ptr.hbm [resolvable:$true] %s465
          %s467 = sshll.u32 [#allocation11], 4
          %s468 = int_to_ptr.vmem [resolvable:$true] %s467
          %470 = dma.hbm_to_vmem [thread:$0]  %s466, 16, %s468, [#allocation12]
        $region40: #{tpu_custom_call.1} parent=11 // pred_fallthru
          _
        // Predicated region
        $region41: #{tpu_custom_call.1} parent=11 // pred_check
          %p471 = pneg %p248
        $region42: #{tpu_custom_call.1} parent=11 // pred_check_branch
          %473 = sbr.rel (%p471) target = $region44
        $region43: #{tpu_custom_call.1} parent=11 // pred_region
          _
        $region44: #{tpu_custom_call.1} parent=11 // pred_fallthru
          _
        // Predicated region
        $region45: #{tpu_custom_call.1} parent=11 // pred_check
          %p474 = pneg %p269
        $region46: #{tpu_custom_call.1} parent=11 // pred_check_branch
          %476 = sbr.rel (%p474) target = $region48
        $region47: #{tpu_custom_call.1} parent=11 // pred_region
          _
        $region48: #{tpu_custom_call.1} parent=11 // pred_fallthru
          _
        // Predicated region
        $region49: #{tpu_custom_call.1} parent=11 // pred_check
          %p477 = pneg %p290
        $region50: #{tpu_custom_call.1} parent=11 // pred_check_branch
          %479 = sbr.rel (%p477) target = $region52
        $region51: #{tpu_custom_call.1} parent=11 // pred_region
          %481 = vsyncadd [#allocation12], 0
          %s482 = sshll.u32 %s11, 4
          %s483 = int_to_ptr.hbm [resolvable:$true] %s482
          %s484 = sshll.u32 [#allocation13], 4
          %s485 = int_to_ptr.vmem [resolvable:$true] %s484
          %490 = dma.hbm_to_vmem [thread:$0]  %s483, 1024, %s485, [#allocation12], 64, 64, 4
        $region52: #{tpu_custom_call.1} parent=11 // pred_fallthru
          _
        // Predicated region
        $region53: #{tpu_custom_call.1} parent=11 // pred_check
          %p491 = pneg %p311
        $region54: #{tpu_custom_call.1} parent=11 // pred_check_branch
          %493 = sbr.rel (%p491) target = $region56
        $region55: #{tpu_custom_call.1} parent=11 // pred_region
          _
        $region56: #{tpu_custom_call.1} parent=11 // pred_fallthru
          _
        // Predicated region
        $region57: #{tpu_custom_call.1} parent=11 // pred_check
          %p494 = pneg %p332
        $region58: #{tpu_custom_call.1} parent=11 // pred_check_branch
          %496 = sbr.rel (%p494) target = $region60
        $region59: #{tpu_custom_call.1} parent=11 // pred_region
          _
        $region60: #{tpu_custom_call.1} parent=11 // pred_fallthru
          _
        // Predicated region
        $region61: #{tpu_custom_call.1} parent=11 // pred_check
          %p497 = pneg %p353
        $region62: #{tpu_custom_call.1} parent=11 // pred_check_branch
          %499 = sbr.rel (%p497) target = $region64
        $region63: #{tpu_custom_call.1} parent=11 // pred_region
          _
        $region64: #{tpu_custom_call.1} parent=11 // pred_fallthru
          _
      $region12: #{tpu_custom_call.1} parent=5 // pred_fallthru
        _
      %p500 = scmp.lt.s32.totalorder %s28, 2
      // Predicated region
      $region65: #{tpu_custom_call.1} parent=5 // pred_check
        %p501 = pneg %p500
      $region66: #{tpu_custom_call.1} parent=5 // pred_check_branch
        %503 = sbr.rel (%p501) target = $region68
      $region67: #{tpu_custom_call.1} parent=5 // pred_region
        // Predicated region
        $region69: #{tpu_custom_call.1} parent=67 // pred_check
          %p504 = pneg %p48
        $region70: #{tpu_custom_call.1} parent=67 // pred_check_branch
          %506 = sbr.rel (%p504) target = $region72
        $region71: #{tpu_custom_call.1} parent=67 // pred_region
          %p507 = scmp.lt.s32.totalorder %s28, 1
          %s508 = scalar_select %p507, %s28, 1
          %s509 = smul.addr %s508, 8
          %s510 = scalar_lea.vmem %s0, %s509
        $region72: #{tpu_custom_call.1} parent=67 // pred_fallthru
          _
        // Predicated region
        $region73: #{tpu_custom_call.1} parent=67 // pred_check
          %p511 = pneg %p74
        $region74: #{tpu_custom_call.1} parent=67 // pred_check_branch
          %513 = sbr.rel (%p511) target = $region76
        $region75: #{tpu_custom_call.1} parent=67 // pred_region
          %p514 = scmp.lt.s32.totalorder %s28, 1
          %s515 = scalar_select %p514, %s28, 1
          %s516 = smul.addr %s515, 8
          %s517 = scalar_lea.vmem %s1, %s516
        $region76: #{tpu_custom_call.1} parent=67 // pred_fallthru
          _
      $region68: #{tpu_custom_call.1} parent=5 // pred_fallthru
        _
      %p518 = scmp.le.s32.totalorder 1, %s28
      %p519 = scmp.lt.s32.totalorder %s28, 3
      %p520 = pnand %p518, %p519
      %p521 = pneg %p520
      // Predicated region
      $region77: #{tpu_custom_call.1} parent=5 // pred_check
        _
      $region78: #{tpu_custom_call.1} parent=5 // pred_check_branch
        %523 = sbr.rel (%p520) target = $region80
      $region79: #{tpu_custom_call.1} parent=5 // pred_region
        %s524 = ssub.s32 %s28, 1
        // Predicated region
        $region81: #{tpu_custom_call.1} parent=79 // pred_check
          %p525 = pneg %p101
        $region82: #{tpu_custom_call.1} parent=79 // pred_check_branch
          %527 = sbr.rel (%p525) target = $region84
        $region83: #{tpu_custom_call.1} parent=79 // pred_region
          %529 = dma.done [#allocation3], 64
        $region84: #{tpu_custom_call.1} parent=79 // pred_fallthru
          _
        // Predicated region
        $region85: #{tpu_custom_call.1} parent=79 // pred_check
          %p530 = pneg %p122
        $region86: #{tpu_custom_call.1} parent=79 // pred_check_branch
          %532 = sbr.rel (%p530) target = $region88
        $region87: #{tpu_custom_call.1} parent=79 // pred_region
          %534 = dma.done [#allocation6], 16
        $region88: #{tpu_custom_call.1} parent=79 // pred_fallthru
          _
        // Predicated region
        $region89: #{tpu_custom_call.1} parent=79 // pred_check
          %p535 = pneg %p164
        $region90: #{tpu_custom_call.1} parent=79 // pred_check_branch
          %537 = sbr.rel (%p535) target = $region92
        $region91: #{tpu_custom_call.1} parent=79 // pred_region
          %539 = dma.done [#allocation6], 16
        $region92: #{tpu_custom_call.1} parent=79 // pred_fallthru
          _
        // Predicated region
        $region93: #{tpu_custom_call.1} parent=79 // pred_check
          %p540 = pneg %p185
        $region94: #{tpu_custom_call.1} parent=79 // pred_check_branch
          %542 = sbr.rel (%p540) target = $region96
        $region95: #{tpu_custom_call.1} parent=79 // pred_region
          %544 = dma.done [#allocation9], 1024
        $region96: #{tpu_custom_call.1} parent=79 // pred_fallthru
          _
        // Predicated region
        $region97: #{tpu_custom_call.1} parent=79 // pred_check
          %p545 = pneg %p206
        $region98: #{tpu_custom_call.1} parent=79 // pred_check_branch
          %547 = sbr.rel (%p545) target = $region100
        $region99: #{tpu_custom_call.1} parent=79 // pred_region
          %549 = dma.done [#allocation9], 64
        $region100: #{tpu_custom_call.1} parent=79 // pred_fallthru
          _
        // Predicated region
        $region101: #{tpu_custom_call.1} parent=79 // pred_check
          %p550 = pneg %p227
        $region102: #{tpu_custom_call.1} parent=79 // pred_check_branch
          %552 = sbr.rel (%p550) target = $region104
        $region103: #{tpu_custom_call.1} parent=79 // pred_region
          %554 = dma.done [#allocation12], 16
        $region104: #{tpu_custom_call.1} parent=79 // pred_fallthru
          _
        // Predicated region
        $region105: #{tpu_custom_call.1} parent=79 // pred_check
          %p555 = pneg %p290
        $region106: #{tpu_custom_call.1} parent=79 // pred_check_branch
          %557 = sbr.rel (%p555) target = $region108
        $region107: #{tpu_custom_call.1} parent=79 // pred_region
          %559 = dma.done [#allocation12], 1024
        $region108: #{tpu_custom_call.1} parent=79 // pred_fallthru
          _
        %p560 = scmp.lt.s32.totalorder %s33, 1
        %s561 = scalar_select %p560, %s33, 1
        %s562 = smul.addr %s561, 8
        %s563 = scalar_lea.vmem %s0, %s562
        %p564 = pneg %p54
        %p565 = pneg %p51
        %p566 = scmp.lt.s32.totalorder %s33, 1
        %s567 = scalar_select %p566, %s33, 1
        %s568 = smul.addr %s567, 8
        %s569 = scalar_lea.vmem %s1, %s568
        %p570 = pneg %p80
        %p571 = pneg %p77
        %p572 = pneg %p101
        %p573 = pneg %p98
        %p574 = pneg %p122
        %p575 = pneg %p119
        %p576 = pneg %p143
        %p577 = pneg %p140
        %p578 = pneg %p164
        %p579 = pneg %p161
        %p580 = pneg %p185
        %p581 = pneg %p182
        %p582 = pneg %p206
        %p583 = pneg %p203
        %p584 = pneg %p227
        %p585 = pneg %p224
        %p586 = pneg %p248
        %p587 = pneg %p245
        %p588 = pneg %p269
        %p589 = pneg %p266
        %p590 = pneg %p290
        %p591 = pneg %p287
        %p592 = pneg %p311
        %p593 = pneg %p308
        %p594 = pneg %p332
        %p595 = pneg %p329
        %p596 = pneg %p353
        %p597 = pneg %p350
        %p598 = pneg %p379
        %p599 = pneg %p376
        %s600 = sand.u32 %s366, 1
        %s601 = scalar_lea.sflag [#allocation4], %s600
        %s602 = sand.u32 %s366, 1
        %s603 = smul.addr %s602, 8
        %s604 = scalar_lea.vmem [#allocation14], %s603
        %p605 = scmp.lt.s32.totalorder %s33, 1
        %s606 = scalar_select %p605, %s33, 1
        %s607 = smul.addr %s606, 8
        %s608 = scalar_lea.vmem %s0, %s607
        %p609 = scmp.lt.s32.totalorder %s33, 1
        %s610 = scalar_select %p609, %s33, 1
        %s611 = smul.addr %s610, 8
        %s612 = scalar_lea.vmem %s1, %s611
        %v614 = vld [vmem:[%s608] sm:$0xff]
        %v615 = vpack.c.bf16 %v614, %v614
        %v616 = vld [vmem:[#allocation2] sm:$0xf]
        %v617 = vld [vmem:[#allocation5] sm:$0x1]
        %v619 = vperm.slane %v617, 0
        %vm621 = vcmask 64512
        %v623 = vsel %vm621, %v615, 0
        %vm625 = vcmask 1043456
        %v627 = vsel %vm625, %v616, 0
        %629 = vmatpush.bf16.msra.mxu0 0
        %630 = vmatpush.bf16.msra.mxu0 0
        %631 = vmatpush.bf16.msra.mxu0 0
        %632 = vmatpush.bf16.msra.mxu0 0
        %633 = vmatpush.bf16.msra.mxu0 0
        %634 = vmatpush.bf16.msra.mxu0 0
        %635 = vmatpush.bf16.msra.mxu0 0
        %636 = vmatpush.bf16.msra.mxu0 %v627
        %637 = vmatmul.bf16.gmra.mxu0 %v623
        %v638 = vpop.f32.mrf.mxu0
        %v639 = vadd.f32 %v619, %v638
        %v640 = vpop.f32.mrf.mxu0
        %641 = vdwg.mxu0
        %v642 = vmax.f32 %v639, 0.0
        %v643 = vpack.c.bf16 %v642, %v642
        %v644 = vld [vmem:[%s4] sm:$0xf]
        %v645 = vld [vmem:[%s4 + $0x4] sm:$0xf]
        %v646 = vld [vmem:[%s4 + $0x8] sm:$0xf]
        %v647 = vld [vmem:[%s4 + $0xc] sm:$0xf]
        %v648 = vld [vmem:[%s4 + $0x10] sm:$0xf]
        %v649 = vld [vmem:[%s4 + $0x14] sm:$0xf]
        %v650 = vld [vmem:[%s4 + $0x18] sm:$0xf]
        %v651 = vld [vmem:[%s4 + $0x1c] sm:$0xf]
        %v652 = vld [vmem:[%s4 + $0x20] sm:$0xf]
        %v653 = vld [vmem:[%s4 + $0x24] sm:$0xf]
        %v654 = vld [vmem:[%s4 + $0x28] sm:$0xf]
        %v655 = vld [vmem:[%s4 + $0x2c] sm:$0xf]
        %v656 = vld [vmem:[%s4 + $0x30] sm:$0xf]
        %v657 = vld [vmem:[%s4 + $0x34] sm:$0xf]
        %v658 = vld [vmem:[%s4 + $0x38] sm:$0xf]
        %v659 = vld [vmem:[%s4 + $0x3c] sm:$0xf]
        %v660 = vld [vmem:[#allocation7] sm:$0x1]
        %v662 = vperm.slane %v660, 0
        %v680 = vunpack.c.l.b16 %v644
        %v681 = vunpack.c.l.b16 %v645
        %v682 = vunpack.c.l.b16 %v646
        %v683 = vunpack.c.l.b16 %v647
        %v684 = vunpack.c.l.b16 %v648
        %v685 = vunpack.c.l.b16 %v649
        %v686 = vunpack.c.l.b16 %v650
        %v687 = vunpack.c.l.b16 %v651
        %v688 = vunpack.c.l.b16 %v652
        %v689 = vunpack.c.l.b16 %v653
        %v690 = vunpack.c.l.b16 %v654
        %v691 = vunpack.c.l.b16 %v655
        %v692 = vunpack.c.l.b16 %v656
        %v693 = vunpack.c.l.b16 %v657
        %v694 = vunpack.c.l.b16 %v658
        %v695 = vunpack.c.l.b16 %v659
        %v696 = vpack.c.b16 %v681, %v680
        %v697 = vpack.c.b16 %v683, %v682
        %v698 = vpack.c.b16 %v685, %v684
        %v699 = vpack.c.b16 %v687, %v686
        %v700 = vpack.c.b16 %v689, %v688
        %v701 = vpack.c.b16 %v691, %v690
        %v702 = vpack.c.b16 %v693, %v692
        %v703 = vpack.c.b16 %v695, %v694
        %712 = vmatpush.bf16.msra.mxu0 %v703
        %713 = vmatpush.bf16.msra.mxu0 %v702
        %714 = vmatpush.bf16.msra.mxu0 %v701
        %715 = vmatpush.bf16.msra.mxu0 %v700
        %716 = vmatpush.bf16.msra.mxu0 %v699
        %717 = vmatpush.bf16.msra.mxu0 %v698
        %718 = vmatpush.bf16.msra.mxu0 %v697
        %719 = vmatpush.bf16.msra.mxu0 %v696
        %720 = vmatmul.bf16.gmra.mxu0 %v643
        %v721 = vpop.f32.mrf.mxu0
        %v722 = vadd.f32 %v662, %v721
        %v723 = vpop.f32.mrf.mxu0
        %724 = vdwg.mxu0
        %v725 = vmax.f32 %v722, 0.0
        %v726 = vpack.c.bf16 %v725, %v725
        %v727 = vld [vmem:[#allocation8] sm:$0xf]
        %v728 = vld [vmem:[#allocation8 + $0x4] sm:$0xf]
        %v729 = vld [vmem:[#allocation8 + $0x8] sm:$0xf]
        %v730 = vld [vmem:[#allocation8 + $0xc] sm:$0xf]
        %v731 = vld [vmem:[#allocation8 + $0x10] sm:$0xf]
        %v732 = vld [vmem:[#allocation8 + $0x14] sm:$0xf]
        %v733 = vld [vmem:[#allocation8 + $0x18] sm:$0xf]
        %v734 = vld [vmem:[#allocation8 + $0x1c] sm:$0xf]
        %v735 = vld [vmem:[#allocation8 + $0x20] sm:$0xf]
        %v736 = vld [vmem:[#allocation8 + $0x24] sm:$0xf]
        %v737 = vld [vmem:[#allocation8 + $0x28] sm:$0xf]
        %v738 = vld [vmem:[#allocation8 + $0x2c] sm:$0xf]
        %v739 = vld [vmem:[#allocation8 + $0x30] sm:$0xf]
        %v740 = vld [vmem:[#allocation8 + $0x34] sm:$0xf]
        %v741 = vld [vmem:[#allocation8 + $0x38] sm:$0xf]
        %v742 = vld [vmem:[#allocation8 + $0x3c] sm:$0xf]
        %v743 = vld [vmem:[%s612] sm:$0xff]
        %v744 = vpack.c.bf16 %v743, %v743
        %v745 = vld [vmem:[#allocation10] sm:$0xf]
        %v747 = vsel %vm621, %v744, 0
        %v750 = vsel %vm625, %v745, 0
        %752 = vmatpush.bf16.msra.mxu0 0
        %753 = vmatpush.bf16.msra.mxu0 0
        %754 = vmatpush.bf16.msra.mxu0 0
        %755 = vmatpush.bf16.msra.mxu0 0
        %756 = vmatpush.bf16.msra.mxu0 0
        %757 = vmatpush.bf16.msra.mxu0 0
        %758 = vmatpush.bf16.msra.mxu0 0
        %759 = vmatpush.bf16.msra.mxu0 %v750
        %760 = vmatmul.bf16.gmra.mxu0 %v747
        %v761 = vpop.f32.mrf.mxu0
        %v762 = vadd.f32 0.0, %v761
        %v763 = vpop.f32.mrf.mxu0
        %764 = vdwg.mxu0
        %v781 = vunpack.c.l.b16 %v727
        %v782 = vunpack.c.l.b16 %v728
        %v783 = vunpack.c.l.b16 %v729
        %v784 = vunpack.c.l.b16 %v730
        %v785 = vunpack.c.l.b16 %v731
        %v786 = vunpack.c.l.b16 %v732
        %v787 = vunpack.c.l.b16 %v733
        %v788 = vunpack.c.l.b16 %v734
        %v789 = vunpack.c.l.b16 %v735
        %v790 = vunpack.c.l.b16 %v736
        %v791 = vunpack.c.l.b16 %v737
        %v792 = vunpack.c.l.b16 %v738
        %v793 = vunpack.c.l.b16 %v739
        %v794 = vunpack.c.l.b16 %v740
        %v795 = vunpack.c.l.b16 %v741
        %v796 = vunpack.c.l.b16 %v742
        %v797 = vpack.c.b16 %v782, %v781
        %v798 = vpack.c.b16 %v784, %v783
        %v799 = vpack.c.b16 %v786, %v785
        %v800 = vpack.c.b16 %v788, %v787
        %v801 = vpack.c.b16 %v790, %v789
        %v802 = vpack.c.b16 %v792, %v791
        %v803 = vpack.c.b16 %v794, %v793
        %v804 = vpack.c.b16 %v796, %v795
        %813 = vmatpush.bf16.msra.mxu0 %v804
        %814 = vmatpush.bf16.msra.mxu0 %v803
        %815 = vmatpush.bf16.msra.mxu0 %v802
        %816 = vmatpush.bf16.msra.mxu0 %v801
        %817 = vmatpush.bf16.msra.mxu0 %v800
        %818 = vmatpush.bf16.msra.mxu0 %v799
        %819 = vmatpush.bf16.msra.mxu0 %v798
        %820 = vmatpush.bf16.msra.mxu0 %v797
        %821 = vmatmul.bf16.gmra.mxu0 %v726
        %v822 = vpop.f32.mrf.mxu0
        %v823 = vadd.f32 %v762, %v822
        %v824 = vpop.f32.mrf.mxu0
        %825 = vdwg.mxu0
        %v826 = vld [vmem:[#allocation11] sm:$0x1]
        %v828 = vperm.slane %v826, 0
        %v830 = vadd.f32 %v823, %v828
        %v831 = vmax.f32 %v830, 0.0
        %v832 = vpack.c.bf16 %v831, %v831
        %v833 = vld [vmem:[%s9] sm:$0xf]
        %v834 = vld [vmem:[%s9 + $0x4] sm:$0xf]
        %v835 = vld [vmem:[%s9 + $0x8] sm:$0xf]
        %v836 = vld [vmem:[%s9 + $0xc] sm:$0xf]
        %v837 = vld [vmem:[%s9 + $0x10] sm:$0xf]
        %v838 = vld [vmem:[%s9 + $0x14] sm:$0xf]
        %v839 = vld [vmem:[%s9 + $0x18] sm:$0xf]
        %v840 = vld [vmem:[%s9 + $0x1c] sm:$0xf]
        %v841 = vld [vmem:[%s9 + $0x20] sm:$0xf]
        %v842 = vld [vmem:[%s9 + $0x24] sm:$0xf]
        %v843 = vld [vmem:[%s9 + $0x28] sm:$0xf]
        %v844 = vld [vmem:[%s9 + $0x2c] sm:$0xf]
        %v845 = vld [vmem:[%s9 + $0x30] sm:$0xf]
        %v846 = vld [vmem:[%s9 + $0x34] sm:$0xf]
        %v847 = vld [vmem:[%s9 + $0x38] sm:$0xf]
        %v848 = vld [vmem:[%s9 + $0x3c] sm:$0xf]
        %v849 = vld [vmem:[%s10] sm:$0x1]
        %v851 = vperm.slane %v849, 0
        %v869 = vunpack.c.l.b16 %v833
        %v870 = vunpack.c.l.b16 %v834
        %v871 = vunpack.c.l.b16 %v835
        %v872 = vunpack.c.l.b16 %v836
        %v873 = vunpack.c.l.b16 %v837
        %v874 = vunpack.c.l.b16 %v838
        %v875 = vunpack.c.l.b16 %v839
        %v876 = vunpack.c.l.b16 %v840
        %v877 = vunpack.c.l.b16 %v841
        %v878 = vunpack.c.l.b16 %v842
        %v879 = vunpack.c.l.b16 %v843
        %v880 = vunpack.c.l.b16 %v844
        %v881 = vunpack.c.l.b16 %v845
        %v882 = vunpack.c.l.b16 %v846
        %v883 = vunpack.c.l.b16 %v847
        %v884 = vunpack.c.l.b16 %v848
        %v885 = vpack.c.b16 %v870, %v869
        %v886 = vpack.c.b16 %v872, %v871
        %v887 = vpack.c.b16 %v874, %v873
        %v888 = vpack.c.b16 %v876, %v875
        %v889 = vpack.c.b16 %v878, %v877
        %v890 = vpack.c.b16 %v880, %v879
        %v891 = vpack.c.b16 %v882, %v881
        %v892 = vpack.c.b16 %v884, %v883
        %901 = vmatpush.bf16.msra.mxu0 %v892
        %902 = vmatpush.bf16.msra.mxu0 %v891
        %903 = vmatpush.bf16.msra.mxu0 %v890
        %904 = vmatpush.bf16.msra.mxu0 %v889
        %905 = vmatpush.bf16.msra.mxu0 %v888
        %906 = vmatpush.bf16.msra.mxu0 %v887
        %907 = vmatpush.bf16.msra.mxu0 %v886
        %908 = vmatpush.bf16.msra.mxu0 %v885
        %909 = vmatmul.bf16.gmra.mxu0 %v832
        %v910 = vpop.f32.mrf.mxu0
        %v911 = vadd.f32 %v851, %v910
        %v912 = vpop.f32.mrf.mxu0
        %913 = vdwg.mxu0
        %v914 = vmax.f32 %v911, 0.0
        %v915 = vpack.c.bf16 %v914, %v914
        %v916 = vld [vmem:[#allocation13] sm:$0xf]
        %v917 = vld [vmem:[#allocation13 + $0x4] sm:$0xf]
        %v918 = vld [vmem:[#allocation13 + $0x8] sm:$0xf]
        %v919 = vld [vmem:[#allocation13 + $0xc] sm:$0xf]
        %v920 = vld [vmem:[#allocation13 + $0x10] sm:$0xf]
        %v921 = vld [vmem:[#allocation13 + $0x14] sm:$0xf]
        %v922 = vld [vmem:[#allocation13 + $0x18] sm:$0xf]
        %v923 = vld [vmem:[#allocation13 + $0x1c] sm:$0xf]
        %v924 = vld [vmem:[#allocation13 + $0x20] sm:$0xf]
        %v925 = vld [vmem:[#allocation13 + $0x24] sm:$0xf]
        %v926 = vld [vmem:[#allocation13 + $0x28] sm:$0xf]
        %v927 = vld [vmem:[#allocation13 + $0x2c] sm:$0xf]
        %v928 = vld [vmem:[#allocation13 + $0x30] sm:$0xf]
        %v929 = vld [vmem:[#allocation13 + $0x34] sm:$0xf]
        %v930 = vld [vmem:[#allocation13 + $0x38] sm:$0xf]
        %v931 = vld [vmem:[#allocation13 + $0x3c] sm:$0xf]
        %v932 = vld [vmem:[%s12] sm:$0x1]
        %v934 = vperm.slane %v932, 0
        %v952 = vunpack.c.l.b16 %v916
        %v953 = vunpack.c.l.b16 %v917
        %v954 = vunpack.c.l.b16 %v918
        %v955 = vunpack.c.l.b16 %v919
        %v956 = vunpack.c.l.b16 %v920
        %v957 = vunpack.c.l.b16 %v921
        %v958 = vunpack.c.l.b16 %v922
        %v959 = vunpack.c.l.b16 %v923
        %v960 = vunpack.c.l.b16 %v924
        %v961 = vunpack.c.l.b16 %v925
        %v962 = vunpack.c.l.b16 %v926
        %v963 = vunpack.c.l.b16 %v927
        %v964 = vunpack.c.l.b16 %v928
        %v965 = vunpack.c.l.b16 %v929
        %v966 = vunpack.c.l.b16 %v930
        %v967 = vunpack.c.l.b16 %v931
        %v968 = vpack.c.b16 %v953, %v952
        %v969 = vpack.c.b16 %v955, %v954
        %v970 = vpack.c.b16 %v957, %v956
        %v971 = vpack.c.b16 %v959, %v958
        %v972 = vpack.c.b16 %v961, %v960
        %v973 = vpack.c.b16 %v963, %v962
        %v974 = vpack.c.b16 %v965, %v964
        %v975 = vpack.c.b16 %v967, %v966
        %984 = vmatpush.bf16.msra.mxu0 %v975
        %985 = vmatpush.bf16.msra.mxu0 %v974
        %986 = vmatpush.bf16.msra.mxu0 %v973
        %987 = vmatpush.bf16.msra.mxu0 %v972
        %988 = vmatpush.bf16.msra.mxu0 %v971
        %989 = vmatpush.bf16.msra.mxu0 %v970
        %990 = vmatpush.bf16.msra.mxu0 %v969
        %991 = vmatpush.bf16.msra.mxu0 %v968
        %992 = vmatmul.bf16.gmra.mxu0 %v915
        %v993 = vpop.f32.mrf.mxu0
        %v994 = vadd.f32 %v934, %v993
        %v995 = vpop.f32.mrf.mxu0
        %996 = vdwg.mxu0
        %v997 = vmax.f32 %v994, 0.0
        %v998 = vpack.c.bf16 %v997, %v997
        %v999 = vld [vmem:[%s13] sm:$0xf]
        %v1000 = vld [vmem:[%s13 + $0x4] sm:$0xf]
        %v1001 = vld [vmem:[%s13 + $0x8] sm:$0xf]
        %v1002 = vld [vmem:[%s13 + $0xc] sm:$0xf]
        %v1003 = vld [vmem:[%s13 + $0x10] sm:$0xf]
        %v1004 = vld [vmem:[%s13 + $0x14] sm:$0xf]
        %v1005 = vld [vmem:[%s13 + $0x18] sm:$0xf]
        %v1006 = vld [vmem:[%s13 + $0x1c] sm:$0xf]
        %v1007 = vld [vmem:[%s13 + $0x20] sm:$0xf]
        %v1008 = vld [vmem:[%s13 + $0x24] sm:$0xf]
        %v1009 = vld [vmem:[%s13 + $0x28] sm:$0xf]
        %v1010 = vld [vmem:[%s13 + $0x2c] sm:$0xf]
        %v1011 = vld [vmem:[%s13 + $0x30] sm:$0xf]
        %v1012 = vld [vmem:[%s13 + $0x34] sm:$0xf]
        %v1013 = vld [vmem:[%s13 + $0x38] sm:$0xf]
        %v1014 = vld [vmem:[%s13 + $0x3c] sm:$0xf]
        %v1015 = vld [vmem:[%s14] sm:$0x1]
        %v1017 = vperm.slane %v1015, 0
        %v1035 = vunpack.c.l.b16 %v999
        %v1036 = vunpack.c.l.b16 %v1000
        %v1037 = vunpack.c.l.b16 %v1001
        %v1038 = vunpack.c.l.b16 %v1002
        %v1039 = vunpack.c.l.b16 %v1003
        %v1040 = vunpack.c.l.b16 %v1004
        %v1041 = vunpack.c.l.b16 %v1005
        %v1042 = vunpack.c.l.b16 %v1006
        %v1043 = vunpack.c.l.b16 %v1007
        %v1044 = vunpack.c.l.b16 %v1008
        %v1045 = vunpack.c.l.b16 %v1009
        %v1046 = vunpack.c.l.b16 %v1010
        %v1047 = vunpack.c.l.b16 %v1011
        %v1048 = vunpack.c.l.b16 %v1012
        %v1049 = vunpack.c.l.b16 %v1013
        %v1050 = vunpack.c.l.b16 %v1014
        %v1051 = vpack.c.b16 %v1036, %v1035
        %v1052 = vpack.c.b16 %v1038, %v1037
        %v1053 = vpack.c.b16 %v1040, %v1039
        %v1054 = vpack.c.b16 %v1042, %v1041
        %v1055 = vpack.c.b16 %v1044, %v1043
        %v1056 = vpack.c.b16 %v1046, %v1045
        %v1057 = vpack.c.b16 %v1048, %v1047
        %v1058 = vpack.c.b16 %v1050, %v1049
        %1067 = vmatpush.bf16.msra.mxu0 %v1058
        %1068 = vmatpush.bf16.msra.mxu0 %v1057
        %1069 = vmatpush.bf16.msra.mxu0 %v1056
        %1070 = vmatpush.bf16.msra.mxu0 %v1055
        %1071 = vmatpush.bf16.msra.mxu0 %v1054
        %1072 = vmatpush.bf16.msra.mxu0 %v1053
        %1073 = vmatpush.bf16.msra.mxu0 %v1052
        %1074 = vmatpush.bf16.msra.mxu0 %v1051
        %1075 = vmatmul.bf16.gmra.mxu0 %v998
        %v1076 = vpop.f32.mrf.mxu0
        %v1077 = vadd.f32 %v1017, %v1076
        %v1078 = vpop.f32.mrf.mxu0
        %1079 = vdwg.mxu0
        %v1080 = vmax.f32 %v1077, 0.0
        %vm1081 = vcmask 130048
        %1082 = vst.msk [vmem:[%s604] sm:$0xff] %vm1081, %v1080
        %s1083 = sand.u32 %s366, 1
        %s1084 = scalar_lea.sflag [#allocation4], %s1083
        %s1085 = sand.u32 %s366, 1
        %s1086 = smul.addr %s1085, 8
        %s1087 = scalar_lea.vmem [#allocation14], %s1086
        // Predicated region
        $region109: #{tpu_custom_call.1} parent=79 // pred_check
          %p1088 = pneg %p376
        $region110: #{tpu_custom_call.1} parent=79 // pred_check_branch
          %1090 = sbr.rel (%p1088) target = $region112
        $region111: #{tpu_custom_call.1} parent=79 // pred_region
          %1092 = vsyncadd %s1084, 0
          %s1093 = smul.addr %s33, 8
          %s1094 = scalar_lea.hbm %s15, %s1093
          %s1096 = sshll.u32 %s1087, 4
          %s1097 = int_to_ptr.vmem [resolvable:$true] %s1096
          %s1098 = sshll.u32 %s1094, 4
          %s1099 = int_to_ptr.hbm [resolvable:$true] %s1098
          %1101 = dma.vmem_to_hbm [thread:$0]  %s1097, 128, %s1099, %s1084
        $region112: #{tpu_custom_call.1} parent=79 // pred_fallthru
          _
      $region80: #{tpu_custom_call.1} parent=5 // pred_fallthru
        _
      %p1102 = scmp.le.s32.totalorder 2, %s28
      // Predicated region
      $region113: #{tpu_custom_call.1} parent=5 // pred_check
        %p1103 = pneg %p1102
      $region114: #{tpu_custom_call.1} parent=5 // pred_check_branch
        %1105 = sbr.rel (%p1103) target = $region116
      $region115: #{tpu_custom_call.1} parent=5 // pred_region
        %s1106 = ssub.s32 %s28, 2
        // Predicated region
        $region117: #{tpu_custom_call.1} parent=115 // pred_check
          %p1107 = pneg %p382
        $region118: #{tpu_custom_call.1} parent=115 // pred_check_branch
          %1109 = sbr.rel (%p1107) target = $region120
        $region119: #{tpu_custom_call.1} parent=115 // pred_region
          %s1110 = sand.u32 %s367, 1
          %s1111 = scalar_lea.sflag [#allocation4], %s1110
          %s1112 = sand.u32 %s367, 1
          %s1113 = smul.addr %s1112, 8
          %s1114 = scalar_lea.vmem [#allocation14], %s1113
          %1116 = dma.done %s1111, 128
        $region120: #{tpu_custom_call.1} parent=115 // pred_fallthru
          _
      $region116: #{tpu_custom_call.1} parent=5 // pred_fallthru
        _
    $region6: #{tpu_custom_call.1} parent=1 // loop_footer
      %s32 = sadd.s32 1, %s28
    $region7: #{tpu_custom_call.1} parent=1 // loop_footer_branch
      %27 = sbr.rel target = $region3
    $region8: #{tpu_custom_call.1} parent=1 // loop_exit
      _
    %1117 = vsyncpa [#allocation3], 1
    %s1118 = scalar_lea.sflag [#allocation3], 1
    %1119 = vsyncpa %s1118, 1
    %1120 = vsyncpa [#allocation6], 1
    %1121 = vsyncpa [#allocation9], 1
    %1122 = vsyncpa [#allocation12], 1
    %1123 = vsyncpa [#allocation4], 1
    %s1124 = scalar_lea.sflag [#allocation4], 1
    %1125 = vsyncpa %s1124, 1

</llo_original>
